<compile_context>
chip_gen: v7x
topology: tpu7x:2x2x1
jax: 0.10.0
libtpu: 0.0.40
codegen_flags: <defaults>
</compile_context>

<pallas_src>
import math
import functools

import jax
import jax.numpy as jnp
from jax import lax
from jax.experimental import pallas as pl
from jax.experimental.pallas import tpu as pltpu


# ----------------------------- kernel helpers ------------------------------

def _layer_norm(x, g, b, eps=1e-5):
    # OpenAI-style LayerNorm (epsilon inside the sqrt); rsqrt -> EUP slot.
    u = jnp.mean(x, axis=-1, keepdims=True)
    d = x - u
    s = jnp.mean(d * d, axis=-1, keepdims=True)
    return g * (d * lax.rsqrt(s + eps)) + b


def _gelu(x):
    # matches the module's gelu(x); tanh -> EUP slot.
    return 0.5 * x * (1.0 + jnp.tanh(math.sqrt(2.0 / math.pi) * (x + 0.044715 * x * x * x)))


# ----------------- fused transformer stack kernel (all layers) --------------

def transformer_stack_kernel(n_head,
                             h_ref,
                             attn_w_ref, attn_b_ref,
                             proj_w_ref, proj_b_ref,
                             ln1_g_ref, ln1_b_ref,
                             fc_w_ref, fc_b_ref,
                             mproj_w_ref, mproj_b_ref,
                             ln2_g_ref, ln2_b_ref,
                             out_ref):
    """grid = (B, L): b is "parallel", l is the sequential layer sweep ("arbitrary").

    The output block index is constant across l, so out_ref stays resident in VMEM and
    carries the residual stream from layer l to layer l+1 (accumulator pattern)."""
    l = pl.program_id(1)

    @pl.when(l == 0)
    def _():
        out_ref[...] = h_ref[...]            # seed residual stream with the embeddings

    x = out_ref[0]                           # (S, D) f32 residual stream
    S, D = x.shape
    H = n_head
    hd = D // H

    # current layer's weights (leading block dim of 1 dropped via [0])
    attn_w = attn_w_ref[0]                   # (H, D, 3*hd) bf16
    attn_b = attn_b_ref[0]                   # (H, 1, 3*hd) f32
    proj_w = proj_w_ref[0]                   # (H, hd, D)   bf16
    proj_b = proj_b_ref[0]                   # (1, D)       f32

    x16 = x.astype(jnp.bfloat16)

    # ---- fused QKV projection, head-major (no in-kernel transposes) ----
    xb = jnp.broadcast_to(x16[None, :, :], (H, S, D))
    qkv = jnp.einsum('hsd,hde->hse', xb, attn_w,
                     preferred_element_type=jnp.float32) + attn_b      # (H, S, 3*hd) f32

    inv_scale = 1.0 / math.sqrt(hd)                                    # scale=True in Attention
    q16 = (qkv[:, :, 0:hd] * inv_scale).astype(jnp.bfloat16)           # fold scale into q
    k16 = qkv[:, :, hd:2 * hd].astype(jnp.bfloat16)
    v16 = qkv[:, :, 2 * hd:3 * hd].astype(jnp.bfloat16)

    # ---- scores + causal mask + softmax (f32 math) ----
    s = jnp.einsum('hqd,hkd->hqk', q16, k16,
                   preferred_element_type=jnp.float32)                 # (H, S, S)
    row = lax.broadcasted_iota(jnp.int32, (1, S, S), 1)
    col = lax.broadcasted_iota(jnp.int32, (1, S, S), 2)
    s = jnp.where(col <= row, s, -1e9)                                 # tril mask
    s = s - jnp.max(s, axis=-1, keepdims=True)
    p = jnp.exp(s)
    p = p * pl.reciprocal(jnp.sum(p, axis=-1, keepdims=True), approx=True)

    av = jnp.einsum('hqk,hkd->hqd', p.astype(jnp.bfloat16), v16,
                    preferred_element_type=jnp.float32)                # (H, S, hd)

    # ---- merge_heads + c_proj fused: merged @ W == sum_h av[h] @ proj_w[h] ----
    ah = jnp.einsum('hqd,hde->hqe', av.astype(jnp.bfloat16), proj_w,
                    preferred_element_type=jnp.float32)                # (H, S, D)
    a = jnp.sum(ah, axis=0) + proj_b                                   # (S, D)

    n = _layer_norm(x + a, ln1_g_ref[0], ln1_b_ref[0])

    # ---- MLP (gelu; resid dropout = identity) ----
    h1 = _gelu(jnp.dot(n.astype(jnp.bfloat16), fc_w_ref[0],
                       preferred_element_type=jnp.float32) + fc_b_ref[0])
    h2 = jnp.dot(h1.astype(jnp.bfloat16), mproj_w_ref[0],
                 preferred_element_type=jnp.float32) + mproj_b_ref[0]

    out_ref[0] = _layer_norm(n + h2, ln2_g_ref[0], ln2_b_ref[0])


_STACK_PARAM_ORDER = ('attn_w', 'attn_b', 'proj_w', 'proj_b',
                      'ln1_g', 'ln1_b',
                      'fc_w', 'fc_b', 'mproj_w', 'mproj_b',
                      'ln2_g', 'ln2_b')


def transformer_stack(h, stacked, n_head):
    """Run all L transformer blocks in one pallas_call.  stacked[k] has a leading L axis."""
    B, S, D = h.shape
    weights = [stacked[k] for k in _STACK_PARAM_ORDER]
    L = weights[0].shape[0]

    def w_spec(arr):
        nd = arr.ndim
        # Index by layer l -> pipeline prefetches layer l+1's weights during layer l.
        return pl.BlockSpec((1,) + arr.shape[1:],
                            lambda b, l, _nd=nd: (l,) + (0,) * (_nd - 1))

    in_specs = [pl.BlockSpec((1, S, D), lambda b, l: (b, 0, 0))] + [w_spec(w) for w in weights]

    return pl.pallas_call(
        functools.partial(transformer_stack_kernel, n_head),
        out_shape=jax.ShapeDtypeStruct((B, S, D), jnp.float32),
        grid=(B, L),
        in_specs=in_specs,
        # Constant block index across l -> residual stream resident across the layer sweep.
        out_specs=pl.BlockSpec((1, S, D), lambda b, l: (b, 0, 0)),
        compiler_params=pltpu.CompilerParams(
            dimension_semantics=("parallel", "arbitrary"),
            vmem_limit_bytes=64 * 1024 * 1024),
    )(h, *weights)


# ---------------------------- classifier head kernel ------------------------

def clf_head_kernel(h_ref, w_ref, b_ref, o_ref):
    # Lane-dense output: n_classes is pre-padded to a multiple of 128.
    o_ref[...] = (jnp.dot(h_ref[...].astype(jnp.bfloat16), w_ref[...],
                          preferred_element_type=jnp.float32) + b_ref[...])


def clf_head(clf_h, w_pad, b_pad):
    N, _ = clf_h.shape
    n_pad = w_pad.shape[1]
    return pl.pallas_call(
        clf_head_kernel,
        out_shape=jax.ShapeDtypeStruct((N, n_pad), jnp.float32),
    )(clf_h, w_pad, b_pad)


# ------------------------------- full forward -------------------------------

def classifier_forward(x, params, n_head):
    """x: int32 [B, S, 2] -- x[..., 0] token ids, x[..., 1] position ids."""
    B, S, _ = x.shape
    # TransformerModel: embed both (token, position) ids then sum over dim 2 (glue gather).
    e = params['embed'][x]            # (B, S, 2, D) f32  (embd dropout = identity)
    h = e.sum(axis=2)                 # (B, S, D)

    h = transformer_stack(h, params['stack'], n_head)

    # ClfHead: select rows where token == clf_token (exactly one per sequence here).
    # NOTE: assumes exactly one clf token per sequence, matching the demo construction.
    flat_tok = x[..., 0].reshape(-1)
    flat_h = h.reshape(-1, h.shape[-1])
    idx = jnp.nonzero(flat_tok == params['clf_token'], size=B)[0]
    clf_h = flat_h[idx]               # (B, D)  (clf dropout = identity)
    logits_pad = clf_head(clf_h, params['clf_w_pad'], params['clf_b_pad'])
    return logits_pad[:, :params['n_classes']]


# --------------------------------- params -----------------------------------

def _prep_attn_weights(attn_w, attn_b, n_head):
    """(D, 3D)/(1, 3D) Conv1D layout -> head-major (H, D, 3*hd)/(H, 1, 3*hd)."""
    D = attn_w.shape[0]
    hd = D // n_head
    w = attn_w.reshape(D, 3, n_head, hd).transpose(2, 0, 1, 3).reshape(n_head, D, 3 * hd)
    b = attn_b.reshape(1, 3, n_head, hd).transpose(2, 0, 1, 3).reshape(n_head, 1, 3 * hd)
    return w, b


def init_params(key, vocab, n_embd, n_head, n_layer, n_classes, clf_token):
    keys = jax.random.split(key, 2 + n_layer)

    def nrm(k, shape):
        return jax.random.normal(k, shape, jnp.float32) * 0.02

    D = n_embd
    hd = D // n_head
    n_pad = ((n_classes + 127) // 128) * 128        # lane-dense classifier output

    clf_w = nrm(keys[1], (D, n_classes))
    clf_w_pad = jnp.zeros((D, n_pad), jnp.float32).at[:, :n_classes].set(clf_w)

    per_layer = {k: [] for k in _STACK_PARAM_ORDER}
    for li in range(n_layer):
        bk = jax.random.split(keys[2 + li], 4)
        attn_w = nrm(bk[0], (D, 3 * D))
        attn_b = jnp.zeros((1, 3 * D), jnp.float32)
        attn_w_h, attn_b_h = _prep_attn_weights(attn_w, attn_b, n_head)
        proj_w = nrm(bk[1], (D, D)).reshape(n_head, hd, D)       # (H, hd, D)
        layer = {
            'attn_w': attn_w_h.astype(jnp.bfloat16),             # (H, D, 3*hd) bf16
            'attn_b': attn_b_h,                                  # (H, 1, 3*hd) f32
            'proj_w': proj_w.astype(jnp.bfloat16),               # (H, hd, D)   bf16
            'proj_b': jnp.zeros((1, D), jnp.float32),
            'ln1_g': jnp.ones((1, D), jnp.float32),
            'ln1_b': jnp.zeros((1, D), jnp.float32),
            'fc_w': nrm(bk[2], (D, 4 * D)).astype(jnp.bfloat16),
            'fc_b': jnp.zeros((1, 4 * D), jnp.float32),
            'mproj_w': nrm(bk[3], (4 * D, D)).astype(jnp.bfloat16),
            'mproj_b': jnp.zeros((1, D), jnp.float32),
            'ln2_g': jnp.ones((1, D), jnp.float32),
            'ln2_b': jnp.zeros((1, D), jnp.float32),
        }
        for k in _STACK_PARAM_ORDER:
            per_layer[k].append(layer[k])

    stack = {k: jnp.stack(v, axis=0) for k, v in per_layer.items()}  # leading L axis

    return {
        'embed': nrm(keys[0], (vocab, D)),                       # f32 (gather + sum in XLA)
        'stack': stack,
        'clf_w_pad': clf_w_pad.astype(jnp.bfloat16),             # (D, n_pad) bf16
        'clf_b_pad': jnp.zeros((1, n_pad), jnp.float32),
        'n_classes': n_classes,
        'clf_token': jnp.int32(clf_token),
    }


# ----------------------------------- main ------------------------------------

if __name__ == "__main__":
    B, S, D, H, L = 2, 8, 32, 4, 2          # batch, seq, n_embd, n_head, n_layer
    vocab, n_ctx, n_classes = 64, 8, 2
    clf_token = 50

    key = jax.random.PRNGKey(0)
    kp, kt = jax.random.split(key)
    params = init_params(kp, vocab, D, H, L, n_classes, clf_token)

    toks = jax.random.randint(kt, (B, S), 0, 40, dtype=jnp.int32)
    toks = toks.at[:, -1].set(clf_token)    # exactly one clf token per sequence
    pos = jnp.broadcast_to(vocab - n_ctx + jnp.arange(S, dtype=jnp.int32), (B, S))
    x = jnp.stack([toks, pos], axis=-1)     # (B, S, 2) int32

    logits = classifier_forward(x, params, H)   # (B, n_classes)
    jax.block_until_ready(logits)
    assert logits.shape == (B, n_classes)
    print("KERNEL_OK")
</pallas_src>

<mosaic_0001>
module attributes {stable_mosaic.version = 11 : i64} {
  func.func @transformer_stack_kernel(%arg0: i32, %arg1: i32, %arg2: memref<1x8x32xf32, #tpu.memory_space<vmem>>, %arg3: memref<1x4x32x24xbf16, #tpu.memory_space<vmem>>, %arg4: memref<1x4x1x24xf32, #tpu.memory_space<vmem>>, %arg5: memref<1x4x8x32xbf16, #tpu.memory_space<vmem>>, %arg6: memref<1x1x32xf32, #tpu.memory_space<vmem>>, %arg7: memref<1x1x32xf32, #tpu.memory_space<vmem>>, %arg8: memref<1x1x32xf32, #tpu.memory_space<vmem>>, %arg9: memref<1x32x128xbf16, #tpu.memory_space<vmem>>, %arg10: memref<1x1x128xf32, #tpu.memory_space<vmem>>, %arg11: memref<1x128x32xbf16, #tpu.memory_space<vmem>>, %arg12: memref<1x1x32xf32, #tpu.memory_space<vmem>>, %arg13: memref<1x1x32xf32, #tpu.memory_space<vmem>>, %arg14: memref<1x1x32xf32, #tpu.memory_space<vmem>>, %arg15: memref<1x8x32xf32, #tpu.memory_space<vmem>>) attributes {dimension_semantics = [#tpu.dimension_semantics<parallel>, #tpu.dimension_semantics<arbitrary>], iteration_bounds = array<i64: 2, 2>, scalar_prefetch = 0 : i64, scratch_operands = 0 : i64, tpu.core_type = #tpu.core_type<tc>, window_params = [{transform_indices = @transform_0, window_bounds = array<i64: 1, 8, 32>}, {transform_indices = @transform_1, window_bounds = array<i64: 1, 4, 32, 24>}, {transform_indices = @transform_2, window_bounds = array<i64: 1, 4, 1, 24>}, {transform_indices = @transform_3, window_bounds = array<i64: 1, 4, 8, 32>}, {transform_indices = @transform_4, window_bounds = array<i64: 1, 1, 32>}, {transform_indices = @transform_5, window_bounds = array<i64: 1, 1, 32>}, {transform_indices = @transform_6, window_bounds = array<i64: 1, 1, 32>}, {transform_indices = @transform_7, window_bounds = array<i64: 1, 32, 128>}, {transform_indices = @transform_8, window_bounds = array<i64: 1, 1, 128>}, {transform_indices = @transform_9, window_bounds = array<i64: 1, 128, 32>}, {transform_indices = @transform_10, window_bounds = array<i64: 1, 1, 32>}, {transform_indices = @transform_11, window_bounds = array<i64: 1, 1, 32>}, {transform_indices = @transform_12, window_bounds = array<i64: 1, 1, 32>}, {transform_indices = @transform_13, window_bounds = array<i64: 1, 8, 32>}]} {
    %c0_i32 = arith.constant 0 : i32
    %0 = arith.cmpi eq, %arg1, %c0_i32 : i32
    %1 = arith.extui %0 : i1 to i32
    %c0_i32_0 = arith.constant 0 : i32
    %2 = arith.cmpi ne, %1, %c0_i32_0 : i32
    scf.if %2 {
      %c0_69 = arith.constant 0 : index
      %c0_70 = arith.constant 0 : index
      %c0_71 = arith.constant 0 : index
      %135 = vector.load %arg2[%c0_69, %c0_70, %c0_71] : memref<1x8x32xf32, #tpu.memory_space<vmem>>, vector<1x8x32xf32>
      %c0_72 = arith.constant 0 : index
      %c0_73 = arith.constant 0 : index
      %c0_74 = arith.constant 0 : index
      %136 = vector.load %arg15[%c0_72, %c0_73, %c0_74] : memref<1x8x32xf32, #tpu.memory_space<vmem>>, vector<1x8x32xf32>
      tpu.vector_store %arg15[%c0_72, %c0_73, %c0_74], %135 {strides = array<i32>} : memref<1x8x32xf32, #tpu.memory_space<vmem>>, vector<1x8x32xf32>,
    } else {
    }
    %c0 = arith.constant 0 : index
    %c0_1 = arith.constant 0 : index
    %c0_2 = arith.constant 0 : index
    %3 = vector.load %arg15[%c0, %c0_1, %c0_2] : memref<1x8x32xf32, #tpu.memory_space<vmem>>, vector<1x8x32xf32>
    %4 = vector.shape_cast %3 : vector<1x8x32xf32> to vector<8x32xf32>
    %c0_3 = arith.constant 0 : index
    %c0_4 = arith.constant 0 : index
    %c0_5 = arith.constant 0 : index
    %c0_6 = arith.constant 0 : index
    %5 = vector.load %arg3[%c0_3, %c0_4, %c0_5, %c0_6] : memref<1x4x32x24xbf16, #tpu.memory_space<vmem>>, vector<1x4x32x24xbf16>
    %6 = vector.shape_cast %5 : vector<1x4x32x24xbf16> to vector<4x32x24xbf16>
    %c0_7 = arith.constant 0 : index
    %c0_8 = arith.constant 0 : index
    %c0_9 = arith.constant 0 : index
    %c0_10 = arith.constant 0 : index
    %7 = vector.load %arg4[%c0_7, %c0_8, %c0_9, %c0_10] : memref<1x4x1x24xf32, #tpu.memory_space<vmem>>, vector<1x4x1x24xf32>
    %8 = vector.shape_cast %7 : vector<1x4x1x24xf32> to vector<4x1x24xf32>
    %c0_11 = arith.constant 0 : index
    %c0_12 = arith.constant 0 : index
    %c0_13 = arith.constant 0 : index
    %c0_14 = arith.constant 0 : index
    %9 = vector.load %arg5[%c0_11, %c0_12, %c0_13, %c0_14] : memref<1x4x8x32xbf16, #tpu.memory_space<vmem>>, vector<1x4x8x32xbf16>
    %10 = vector.shape_cast %9 : vector<1x4x8x32xbf16> to vector<4x8x32xbf16>
    %c0_15 = arith.constant 0 : index
    %c0_16 = arith.constant 0 : index
    %c0_17 = arith.constant 0 : index
    %11 = vector.load %arg6[%c0_15, %c0_16, %c0_17] : memref<1x1x32xf32, #tpu.memory_space<vmem>>, vector<1x1x32xf32>
    %12 = vector.shape_cast %11 : vector<1x1x32xf32> to vector<1x32xf32>
    %13 = arith.truncf %4 : vector<8x32xf32> to vector<8x32xbf16>
    %14 = vector.shape_cast %13 : vector<8x32xbf16> to vector<1x8x32xbf16>
    %15 = vector.shape_cast %14 : vector<1x8x32xbf16> to vector<1x8x32xbf16>
    %16 = vector.broadcast %15 : vector<1x8x32xbf16> to vector<4x8x32xbf16>
    "tpu.trace_start"() <{level = 10 : i32, message = "hsd,hde->hse"}> : () -> ()
    %cst = arith.constant dense<0.000000e+00> : vector<4x8x24xf32>
    %17 = tpu.matmul %16, %6, %cst {dimension_numbers = #tpu.dot_dimension_numbers<[2], [1], [1], [2], [0, 0, 0, 1, 1, 2], [0], [0]>} : vector<4x8x32xbf16>, vector<4x32x24xbf16>, vector<4x8x24xf32> -> vector<4x8x24xf32>
    "tpu.trace_stop"() : () -> ()
    %18 = vector.broadcast %8 : vector<4x1x24xf32> to vector<4x8x24xf32>
    %19 = arith.addf %17, %18 : vector<4x8x24xf32>
    %20 = vector.extract_strided_slice %19 {offsets = [0, 0, 0], sizes = [4, 8, 8], strides = [1, 1, 1]} : vector<4x8x24xf32> to vector<4x8x8xf32>
    %cst_18 = arith.constant 0.353553385 : f32
    %21 = vector.broadcast %cst_18 : f32 to vector<4x8x8xf32>
    %22 = arith.mulf %20, %21 : vector<4x8x8xf32>
    %23 = arith.truncf %22 : vector<4x8x8xf32> to vector<4x8x8xbf16>
    %24 = vector.extract_strided_slice %19 {offsets = [0, 0, 8], sizes = [4, 8, 8], strides = [1, 1, 1]} : vector<4x8x24xf32> to vector<4x8x8xf32>
    %25 = arith.truncf %24 : vector<4x8x8xf32> to vector<4x8x8xbf16>
    %26 = vector.extract_strided_slice %19 {offsets = [0, 0, 16], sizes = [4, 8, 8], strides = [1, 1, 1]} : vector<4x8x24xf32> to vector<4x8x8xf32>
    %27 = arith.truncf %26 : vector<4x8x8xf32> to vector<4x8x8xbf16>
    "tpu.trace_start"() <{level = 10 : i32, message = "hqd,hkd->hqk"}> : () -> ()
    %cst_19 = arith.constant dense<0.000000e+00> : vector<4x8x8xf32>
    %28 = tpu.matmul %23, %25, %cst_19 {dimension_numbers = #tpu.dot_dimension_numbers<[2], [2], [1], [1], [0, 0, 0, 1, 1, 1], [0], [0]>} : vector<4x8x8xbf16>, vector<4x8x8xbf16>, vector<4x8x8xf32> -> vector<4x8x8xf32>
    "tpu.trace_stop"() : () -> ()
    %29 = tpu.iota {dimensions = array<i32: 1>} : vector<1x8x8xi32>
    %30 = tpu.iota {dimensions = array<i32: 2>} : vector<1x8x8xi32>
    %31 = arith.cmpi sle, %30, %29 : vector<1x8x8xi32>
    %cst_20 = arith.constant -1.000000e+09 : f32
    %32 = vector.shape_cast %31 : vector<1x8x8xi1> to vector<1x8x8xi1>
    %33 = vector.broadcast %32 : vector<1x8x8xi1> to vector<4x8x8xi1>
    %34 = vector.broadcast %cst_20 : f32 to vector<4x8x8xf32>
    %35 = arith.select %33, %28, %34 : vector<4x8x8xi1>, vector<4x8x8xf32>
    %cst_21 = arith.constant dense<0xFF800000> : vector<4x8xf32>
    %36 = vector.multi_reduction <maximumf>, %35, %cst_21 [2] : vector<4x8x8xf32> to vector<4x8xf32>
    %37 = vector.shape_cast %36 : vector<4x8xf32> to vector<4x8x1xf32>
    %38 = vector.broadcast %37 : vector<4x8x1xf32> to vector<4x8x8xf32>
    %39 = arith.subf %35, %38 : vector<4x8x8xf32>
    %40 = math.exp %39 : vector<4x8x8xf32>
    %cst_22 = arith.constant dense<0.000000e+00> : vector<4x8xf32>
    %41 = vector.multi_reduction <add>, %40, %cst_22 [2] : vector<4x8x8xf32> to vector<4x8xf32>
    %42 = vector.shape_cast %41 : vector<4x8xf32> to vector<4x8x1xf32>
    %43 = tpu.reciprocal %42 {approx = true} : vector<4x8x1xf32> -> vector<4x8x1xf32>
    %44 = vector.broadcast %43 : vector<4x8x1xf32> to vector<4x8x8xf32>
    %45 = arith.mulf %40, %44 : vector<4x8x8xf32>
    %46 = arith.truncf %45 : vector<4x8x8xf32> to vector<4x8x8xbf16>
    "tpu.trace_start"() <{level = 10 : i32, message = "hqk,hkd->hqd"}> : () -> ()
    %cst_23 = arith.constant dense<0.000000e+00> : vector<4x8x8xf32>
    %47 = tpu.matmul %46, %27, %cst_23 {dimension_numbers = #tpu.dot_dimension_numbers<[2], [1], [1], [2], [0, 0, 0, 1, 1, 2], [0], [0]>} : vector<4x8x8xbf16>, vector<4x8x8xbf16>, vector<4x8x8xf32> -> vector<4x8x8xf32>
    "tpu.trace_stop"() : () -> ()
    %48 = arith.truncf %47 : vector<4x8x8xf32> to vector<4x8x8xbf16>
    "tpu.trace_start"() <{level = 10 : i32, message = "hqd,hde->hqe"}> : () -> ()
    %cst_24 = arith.constant dense<0.000000e+00> : vector<4x8x32xf32>
    %49 = tpu.matmul %48, %10, %cst_24 {dimension_numbers = #tpu.dot_dimension_numbers<[2], [1], [1], [2], [0, 0, 0, 1, 1, 2], [0], [0]>} : vector<4x8x8xbf16>, vector<4x8x32xbf16>, vector<4x8x32xf32> -> vector<4x8x32xf32>
    "tpu.trace_stop"() : () -> ()
    %cst_25 = arith.constant dense<0.000000e+00> : vector<8x32xf32>
    %50 = vector.multi_reduction <add>, %49, %cst_25 [0] : vector<4x8x32xf32> to vector<8x32xf32>
    %51 = vector.broadcast %12 : vector<1x32xf32> to vector<8x32xf32>
    %52 = arith.addf %50, %51 : vector<8x32xf32>
    %53 = arith.addf %4, %52 : vector<8x32xf32>
    %c0_26 = arith.constant 0 : index
    %c0_27 = arith.constant 0 : index
    %c0_28 = arith.constant 0 : index
    %54 = vector.load %arg7[%c0_26, %c0_27, %c0_28] : memref<1x1x32xf32, #tpu.memory_space<vmem>>, vector<1x1x32xf32>
    %55 = vector.shape_cast %54 : vector<1x1x32xf32> to vector<1x32xf32>
    %c0_29 = arith.constant 0 : index
    %c0_30 = arith.constant 0 : index
    %c0_31 = arith.constant 0 : index
    %56 = vector.load %arg8[%c0_29, %c0_30, %c0_31] : memref<1x1x32xf32, #tpu.memory_space<vmem>>, vector<1x1x32xf32>
    %57 = vector.shape_cast %56 : vector<1x1x32xf32> to vector<1x32xf32>
    %cst_32 = arith.constant dense<0.000000e+00> : vector<8xf32>
    %58 = vector.multi_reduction <add>, %53, %cst_32 [1] : vector<8x32xf32> to vector<8xf32>
    %59 = vector.shape_cast %58 : vector<8xf32> to vector<8x1xf32>
    %cst_33 = arith.constant 3.200000e+01 : f32
    %60 = vector.broadcast %cst_33 : f32 to vector<8x1xf32>
    %61 = arith.divf %59, %60 : vector<8x1xf32>
    %62 = vector.broadcast %61 : vector<8x1xf32> to vector<8x32xf32>
    %63 = arith.subf %53, %62 : vector<8x32xf32>
    %64 = arith.mulf %63, %63 : vector<8x32xf32>
    %cst_34 = arith.constant dense<0.000000e+00> : vector<8xf32>
    %65 = vector.multi_reduction <add>, %64, %cst_34 [1] : vector<8x32xf32> to vector<8xf32>
    %66 = vector.shape_cast %65 : vector<8xf32> to vector<8x1xf32>
    %cst_35 = arith.constant 3.200000e+01 : f32
    %67 = vector.broadcast %cst_35 : f32 to vector<8x1xf32>
    %68 = arith.divf %66, %67 : vector<8x1xf32>
    %cst_36 = arith.constant 9.99999974E-6 : f32
    %69 = vector.broadcast %cst_36 : f32 to vector<8x1xf32>
    %70 = arith.addf %68, %69 : vector<8x1xf32>
    %71 = math.rsqrt %70 : vector<8x1xf32>
    %72 = vector.broadcast %71 : vector<8x1xf32> to vector<8x32xf32>
    %73 = arith.mulf %63, %72 : vector<8x32xf32>
    %74 = vector.broadcast %55 : vector<1x32xf32> to vector<8x32xf32>
    %75 = arith.mulf %74, %73 : vector<8x32xf32>
    %76 = vector.broadcast %57 : vector<1x32xf32> to vector<8x32xf32>
    %77 = arith.addf %75, %76 : vector<8x32xf32>
    %78 = arith.truncf %77 : vector<8x32xf32> to vector<8x32xbf16>
    %c0_37 = arith.constant 0 : index
    %c0_38 = arith.constant 0 : index
    %c0_39 = arith.constant 0 : index
    %79 = vector.load %arg9[%c0_37, %c0_38, %c0_39] : memref<1x32x128xbf16, #tpu.memory_space<vmem>>, vector<1x32x128xbf16>
    %80 = vector.shape_cast %79 : vector<1x32x128xbf16> to vector<32x128xbf16>
    %cst_40 = arith.constant dense<0.000000e+00> : vector<8x128xf32>
    %81 = tpu.matmul %78, %80, %cst_40 {dimension_numbers = #tpu.dot_dimension_numbers<[1], [0], [0], [1], [0, 0, 1, 1], [], []>} : vector<8x32xbf16>, vector<32x128xbf16>, vector<8x128xf32> -> vector<8x128xf32>
    %c0_41 = arith.constant 0 : index
    %c0_42 = arith.constant 0 : index
    %c0_43 = arith.constant 0 : index
    %82 = vector.load %arg10[%c0_41, %c0_42, %c0_43] : memref<1x1x128xf32, #tpu.memory_space<vmem>>, vector<1x1x128xf32>
    %83 = vector.shape_cast %82 : vector<1x1x128xf32> to vector<1x128xf32>
    %84 = vector.broadcast %83 : vector<1x128xf32> to vector<8x128xf32>
    %85 = arith.addf %81, %84 : vector<8x128xf32>
    %cst_44 = arith.constant 5.000000e-01 : f32
    %86 = vector.broadcast %cst_44 : f32 to vector<8x128xf32>
    %87 = arith.mulf %86, %85 : vector<8x128xf32>
    %cst_45 = arith.constant 4.471500e-02 : f32
    %88 = vector.broadcast %cst_45 : f32 to vector<8x128xf32>
    %89 = arith.mulf %88, %85 : vector<8x128xf32>
    %90 = arith.mulf %89, %85 : vector<8x128xf32>
    %91 = arith.mulf %90, %85 : vector<8x128xf32>
    %92 = arith.addf %85, %91 : vector<8x128xf32>
    %cst_46 = arith.constant 0.797884583 : f32
    %93 = vector.broadcast %cst_46 : f32 to vector<8x128xf32>
    %94 = arith.mulf %93, %92 : vector<8x128xf32>
    %95 = math.tanh %94 : vector<8x128xf32>
    %cst_47 = arith.constant 1.000000e+00 : f32
    %96 = vector.broadcast %cst_47 : f32 to vector<8x128xf32>
    %97 = arith.addf %96, %95 : vector<8x128xf32>
    %98 = arith.mulf %87, %97 : vector<8x128xf32>
    %99 = arith.truncf %98 : vector<8x128xf32> to vector<8x128xbf16>
    %c0_48 = arith.constant 0 : index
    %c0_49 = arith.constant 0 : index
    %c0_50 = arith.constant 0 : index
    %100 = vector.load %arg11[%c0_48, %c0_49, %c0_50] : memref<1x128x32xbf16, #tpu.memory_space<vmem>>, vector<1x128x32xbf16>
    %101 = vector.shape_cast %100 : vector<1x128x32xbf16> to vector<128x32xbf16>
    %cst_51 = arith.constant dense<0.000000e+00> : vector<8x32xf32>
    %102 = tpu.matmul %99, %101, %cst_51 {dimension_numbers = #tpu.dot_dimension_numbers<[1], [0], [0], [1], [0, 0, 1, 1], [], []>} : vector<8x128xbf16>, vector<128x32xbf16>, vector<8x32xf32> -> vector<8x32xf32>
    %c0_52 = arith.constant 0 : index
    %c0_53 = arith.constant 0 : index
    %c0_54 = arith.constant 0 : index
    %103 = vector.load %arg12[%c0_52, %c0_53, %c0_54] : memref<1x1x32xf32, #tpu.memory_space<vmem>>, vector<1x1x32xf32>
    %104 = vector.shape_cast %103 : vector<1x1x32xf32> to vector<1x32xf32>
    %105 = vector.broadcast %104 : vector<1x32xf32> to vector<8x32xf32>
    %106 = arith.addf %102, %105 : vector<8x32xf32>
    %107 = arith.addf %77, %106 : vector<8x32xf32>
    %c0_55 = arith.constant 0 : index
    %c0_56 = arith.constant 0 : index
    %c0_57 = arith.constant 0 : index
    %108 = vector.load %arg13[%c0_55, %c0_56, %c0_57] : memref<1x1x32xf32, #tpu.memory_space<vmem>>, vector<1x1x32xf32>
    %109 = vector.shape_cast %108 : vector<1x1x32xf32> to vector<1x32xf32>
    %c0_58 = arith.constant 0 : index
    %c0_59 = arith.constant 0 : index
    %c0_60 = arith.constant 0 : index
    %110 = vector.load %arg14[%c0_58, %c0_59, %c0_60] : memref<1x1x32xf32, #tpu.memory_space<vmem>>, vector<1x1x32xf32>
    %111 = vector.shape_cast %110 : vector<1x1x32xf32> to vector<1x32xf32>
    %cst_61 = arith.constant dense<0.000000e+00> : vector<8xf32>
    %112 = vector.multi_reduction <add>, %107, %cst_61 [1] : vector<8x32xf32> to vector<8xf32>
    %113 = vector.shape_cast %112 : vector<8xf32> to vector<8x1xf32>
    %cst_62 = arith.constant 3.200000e+01 : f32
    %114 = vector.broadcast %cst_62 : f32 to vector<8x1xf32>
    %115 = arith.divf %113, %114 : vector<8x1xf32>
    %116 = vector.broadcast %115 : vector<8x1xf32> to vector<8x32xf32>
    %117 = arith.subf %107, %116 : vector<8x32xf32>
    %118 = arith.mulf %117, %117 : vector<8x32xf32>
    %cst_63 = arith.constant dense<0.000000e+00> : vector<8xf32>
    %119 = vector.multi_reduction <add>, %118, %cst_63 [1] : vector<8x32xf32> to vector<8xf32>
    %120 = vector.shape_cast %119 : vector<8xf32> to vector<8x1xf32>
    %cst_64 = arith.constant 3.200000e+01 : f32
    %121 = vector.broadcast %cst_64 : f32 to vector<8x1xf32>
    %122 = arith.divf %120, %121 : vector<8x1xf32>
    %cst_65 = arith.constant 9.99999974E-6 : f32
    %123 = vector.broadcast %cst_65 : f32 to vector<8x1xf32>
    %124 = arith.addf %122, %123 : vector<8x1xf32>
    %125 = math.rsqrt %124 : vector<8x1xf32>
    %126 = vector.broadcast %125 : vector<8x1xf32> to vector<8x32xf32>
    %127 = arith.mulf %117, %126 : vector<8x32xf32>
    %128 = vector.broadcast %109 : vector<1x32xf32> to vector<8x32xf32>
    %129 = arith.mulf %128, %127 : vector<8x32xf32>
    %130 = vector.broadcast %111 : vector<1x32xf32> to vector<8x32xf32>
    %131 = arith.addf %129, %130 : vector<8x32xf32>
    %c0_66 = arith.constant 0 : index
    %c0_67 = arith.constant 0 : index
    %c0_68 = arith.constant 0 : index
    %132 = vector.load %arg15[%c0_66, %c0_67, %c0_68] : memref<1x8x32xf32, #tpu.memory_space<vmem>>, vector<1x8x32xf32>
    %133 = vector.shape_cast %132 : vector<1x8x32xf32> to vector<8x32xf32>
    %134 = vector.shape_cast %131 : vector<8x32xf32> to vector<1x8x32xf32>
    tpu.vector_store %arg15[%c0_66, %c0_67, %c0_68], %134 {strides = array<i32>} : memref<1x8x32xf32, #tpu.memory_space<vmem>>, vector<1x8x32xf32>,
    return
  }
  func.func @transform_0(%arg0: i32, %arg1: i32) -> (i32, i32, i32) {
    %c0_i32 = arith.constant 0 : i32
    %c0_i32_0 = arith.constant 0 : i32
    %c0_i32_1 = arith.constant 0 : i32
    return %arg0, %c0_i32, %c0_i32_0 : i32, i32, i32
  }
  func.func @transform_1(%arg0: i32, %arg1: i32) -> (i32, i32, i32, i32) {
    %c0_i32 = arith.constant 0 : i32
    %c0_i32_0 = arith.constant 0 : i32
    %c0_i32_1 = arith.constant 0 : i32
    %c0_i32_2 = arith.constant 0 : i32
    return %arg1, %c0_i32, %c0_i32_0, %c0_i32_1 : i32, i32, i32, i32
  }
  func.func @transform_2(%arg0: i32, %arg1: i32) -> (i32, i32, i32, i32) {
    %c0_i32 = arith.constant 0 : i32
    %c0_i32_0 = arith.constant 0 : i32
    %c0_i32_1 = arith.constant 0 : i32
    %c0_i32_2 = arith.constant 0 : i32
    return %arg1, %c0_i32, %c0_i32_0, %c0_i32_1 : i32, i32, i32, i32
  }
  func.func @transform_3(%arg0: i32, %arg1: i32) -> (i32, i32, i32, i32) {
    %c0_i32 = arith.constant 0 : i32
    %c0_i32_0 = arith.constant 0 : i32
    %c0_i32_1 = arith.constant 0 : i32
    %c0_i32_2 = arith.constant 0 : i32
    return %arg1, %c0_i32, %c0_i32_0, %c0_i32_1 : i32, i32, i32, i32
  }
  func.func @transform_4(%arg0: i32, %arg1: i32) -> (i32, i32, i32) {
    %c0_i32 = arith.constant 0 : i32
    %c0_i32_0 = arith.constant 0 : i32
    %c0_i32_1 = arith.constant 0 : i32
    return %arg1, %c0_i32, %c0_i32_0 : i32, i32, i32
  }
  func.func @transform_5(%arg0: i32, %arg1: i32) -> (i32, i32, i32) {
    %c0_i32 = arith.constant 0 : i32
    %c0_i32_0 = arith.constant 0 : i32
    %c0_i32_1 = arith.constant 0 : i32
    return %arg1, %c0_i32, %c0_i32_0 : i32, i32, i32
  }
  func.func @transform_6(%arg0: i32, %arg1: i32) -> (i32, i32, i32) {
    %c0_i32 = arith.constant 0 : i32
    %c0_i32_0 = arith.constant 0 : i32
    %c0_i32_1 = arith.constant 0 : i32
    return %arg1, %c0_i32, %c0_i32_0 : i32, i32, i32
  }
  func.func @transform_7(%arg0: i32, %arg1: i32) -> (i32, i32, i32) {
    %c0_i32 = arith.constant 0 : i32
    %c0_i32_0 = arith.constant 0 : i32
    %c0_i32_1 = arith.constant 0 : i32
    return %arg1, %c0_i32, %c0_i32_0 : i32, i32, i32
  }
  func.func @transform_8(%arg0: i32, %arg1: i32) -> (i32, i32, i32) {
    %c0_i32 = arith.constant 0 : i32
    %c0_i32_0 = arith.constant 0 : i32
    %c0_i32_1 = arith.constant 0 : i32
    return %arg1, %c0_i32, %c0_i32_0 : i32, i32, i32
  }
  func.func @transform_9(%arg0: i32, %arg1: i32) -> (i32, i32, i32) {
    %c0_i32 = arith.constant 0 : i32
    %c0_i32_0 = arith.constant 0 : i32
    %c0_i32_1 = arith.constant 0 : i32
    return %arg1, %c0_i32, %c0_i32_0 : i32, i32, i32
  }
  func.func @transform_10(%arg0: i32, %arg1: i32) -> (i32, i32, i32) {
    %c0_i32 = arith.constant 0 : i32
    %c0_i32_0 = arith.constant 0 : i32
    %c0_i32_1 = arith.constant 0 : i32
    return %arg1, %c0_i32, %c0_i32_0 : i32, i32, i32
  }
  func.func @transform_11(%arg0: i32, %arg1: i32) -> (i32, i32, i32) {
    %c0_i32 = arith.constant 0 : i32
    %c0_i32_0 = arith.constant 0 : i32
    %c0_i32_1 = arith.constant 0 : i32
    return %arg1, %c0_i32, %c0_i32_0 : i32, i32, i32
  }
  func.func @transform_12(%arg0: i32, %arg1: i32) -> (i32, i32, i32) {
    %c0_i32 = arith.constant 0 : i32
    %c0_i32_0 = arith.constant 0 : i32
    %c0_i32_1 = arith.constant 0 : i32
    return %arg1, %c0_i32, %c0_i32_0 : i32, i32, i32
  }
  func.func @transform_13(%arg0: i32, %arg1: i32) -> (i32, i32, i32) {
    %c0_i32 = arith.constant 0 : i32
    %c0_i32_0 = arith.constant 0 : i32
    %c0_i32_1 = arith.constant 0 : i32
    return %arg0, %c0_i32, %c0_i32_0 : i32, i32, i32
  }
}

</mosaic_0001>

<llo_original>
// kernel: tpu_custom_call.1
$region0: #{tpu_custom_call.1}
  #allocation0 [shape = 'u32[]', space=smem, size = 0x4, offset = 0x4, fixed_abs, tag = 'smem constant byte address 0x4 - core index']
  #allocation1 [shape = 'u32[144,128]{1,0:T(1,128)}', space=vmem, size = 0x12000, scoped, tag = 'internal scratch']
  %s0 = inlined_call_operand.hbm [shape: f32[2,8,32], index: 0, kind: input, shape index: {}]
  %s1 = inlined_call_operand.hbm [shape: bf16[2,4,32,24], index: 1, kind: input, shape index: {}]
  %s2 = inlined_call_operand.hbm [shape: f32[2,4,1,24], index: 2, kind: input, shape index: {}]
  %s3 = inlined_call_operand.hbm [shape: bf16[2,4,8,32], index: 3, kind: input, shape index: {}]
  %s4 = inlined_call_operand.hbm [shape: f32[2,1,32], index: 4, kind: input, shape index: {}]
  %s5 = inlined_call_operand.hbm [shape: f32[2,1,32], index: 5, kind: input, shape index: {}]
  %s6 = inlined_call_operand.hbm [shape: f32[2,1,32], index: 6, kind: input, shape index: {}]
  %s7 = inlined_call_operand.hbm [shape: bf16[2,32,128], index: 7, kind: input, shape index: {}]
  %s8 = inlined_call_operand.hbm [shape: f32[2,1,128], index: 8, kind: input, shape index: {}]
  %s9 = inlined_call_operand.hbm [shape: bf16[2,128,32], index: 9, kind: input, shape index: {}]
  %s10 = inlined_call_operand.hbm [shape: f32[2,1,32], index: 10, kind: input, shape index: {}]
  %s11 = inlined_call_operand.hbm [shape: f32[2,1,32], index: 11, kind: input, shape index: {}]
  %s12 = inlined_call_operand.hbm [shape: f32[2,1,32], index: 12, kind: input, shape index: {}]
  %s13 = inlined_call_operand.hbm [shape: f32[2,8,32], index: 13, kind: output, shape index: {}]
  %s14 = sld [smem:[#allocation0]]
  $region141: #{tpu_custom_call.1} parent=0
    _
  %s16 = ssub.s32 1, %s14
  %s17 = scalar_select 0, %s16, %s14
  $region1: #{tpu_custom_call.1} parent=0
    #allocation2 [shape = 'u8[8192]{0}', space=vmem, size = 0x2000, scoped, tag = 'input window, operand 0']
    #allocation3 [shape = 's32[2]{0}', space=sflag, size = 0x8, scoped, tag = 'scoped memory for tpu_custom_call.1']
    #allocation4 [shape = 's32[2]{0}', space=sflag, size = 0x8, scoped, tag = 'scoped memory for tpu_custom_call.1']
    #allocation5 [shape = 'u8[65536]{0}', space=vmem, size = 0x10000, scoped, tag = 'input window, operand 1']
    #allocation6 [shape = 's32[2]{0}', space=sflag, size = 0x8, scoped, tag = 'scoped memory for tpu_custom_call.1']
    #allocation7 [shape = 'u8[4096]{0}', space=vmem, size = 0x1000, scoped, tag = 'input window, operand 2']
    #allocation8 [shape = 'u8[16384]{0}', space=vmem, size = 0x4000, scoped, tag = 'input window, operand 3']
    #allocation9 [shape = 's32[2]{0}', space=sflag, size = 0x8, scoped, tag = 'scoped memory for tpu_custom_call.1']
    #allocation10 [shape = 'u8[1024]{0}', space=vmem, size = 0x400, scoped, tag = 'input window, operand 4']
    #allocation11 [shape = 'u8[1024]{0}', space=vmem, size = 0x400, scoped, tag = 'input window, operand 5']
    #allocation12 [shape = 's32[2]{0}', space=sflag, size = 0x8, scoped, tag = 'scoped memory for tpu_custom_call.1']
    #allocation13 [shape = 'u8[1024]{0}', space=vmem, size = 0x400, scoped, tag = 'input window, operand 6']
    #allocation14 [shape = 'u8[16384]{0}', space=vmem, size = 0x4000, scoped, tag = 'input window, operand 7']
    #allocation15 [shape = 's32[2]{0}', space=sflag, size = 0x8, scoped, tag = 'scoped memory for tpu_custom_call.1']
    #allocation16 [shape = 'u8[1024]{0}', space=vmem, size = 0x400, scoped, tag = 'input window, operand 8']
    #allocation17 [shape = 'u8[65536]{0}', space=vmem, size = 0x10000, scoped, tag = 'input window, operand 9']
    #allocation18 [shape = 's32[2]{0}', space=sflag, size = 0x8, scoped, tag = 'scoped memory for tpu_custom_call.1']
    #allocation19 [shape = 'u8[1024]{0}', space=vmem, size = 0x400, scoped, tag = 'input window, operand 10']
    #allocation20 [shape = 'u8[1024]{0}', space=vmem, size = 0x400, scoped, tag = 'input window, operand 11']
    #allocation21 [shape = 's32[2]{0}', space=sflag, size = 0x8, scoped, tag = 'scoped memory for tpu_custom_call.1']
    #allocation22 [shape = 'u8[1024]{0}', space=vmem, size = 0x400, scoped, tag = 'input window, operand 12']
    #allocation23 [shape = 'u8[8192]{0}', space=vmem, size = 0x2000, scoped, tag = 'output window, operand 0']
    %18 = vsyncpa [#allocation3], 0
    %s19 = scalar_lea.sflag [#allocation3], 1
    %20 = vsyncpa %s19, 0
    %21 = vsyncpa [#allocation6], 0
    %s22 = scalar_lea.sflag [#allocation6], 1
    %23 = vsyncpa %s22, 0
    %24 = vsyncpa [#allocation9], 0
    %s25 = scalar_lea.sflag [#allocation9], 1
    %26 = vsyncpa %s25, 0
    %27 = vsyncpa [#allocation12], 0
    %s28 = scalar_lea.sflag [#allocation12], 1
    %29 = vsyncpa %s28, 0
    %30 = vsyncpa [#allocation15], 0
    %s31 = scalar_lea.sflag [#allocation15], 1
    %32 = vsyncpa %s31, 0
    %33 = vsyncpa [#allocation18], 0
    %s34 = scalar_lea.sflag [#allocation18], 1
    %35 = vsyncpa %s34, 0
    %36 = vsyncpa [#allocation21], 0
    %s37 = scalar_lea.sflag [#allocation21], 1
    %38 = vsyncpa %s37, 0
    %39 = vsyncpa [#allocation4], 0
    %s40 = scalar_lea.sflag [#allocation4], 1
    %41 = vsyncpa %s40, 0
    loop: start=0, step=1, limit=6
    $region2: #{tpu_custom_call.1} parent=1 // loop_pre_header
      _
    $region3: #{tpu_custom_call.1} parent=1 // loop_header
      %s43 = sphi 0, %s47
      %p44 = scmp.ge.s32.totalorder %s43, 6
      %s50 = sphi 0, %s62
      %s51 = sphi 0, %s58
      %s52 = sphi 0, %s50
      %s53 = sphi 0, %s51
      %s54 = sphi 0, %s52
      %s55 = sphi 0, %s53
      %s65 = sphi 0, %s67
      %s68 = sphi 0, %s65
      %s69 = sphi 0, %s68
      %s85 = sphi 0, %s69
      %s91 = sphi 0, %s93
      %s94 = sphi 0, %s91
      %s95 = sphi 0, %s94
      %s111 = sphi 0, %s95
      %s117 = sphi 0, %s119
      %s120 = sphi 0, %s117
      %s121 = sphi 0, %s120
      %s137 = sphi 0, %s121
      %s143 = sphi 0, %s145
      %s146 = sphi 0, %s143
      %s147 = sphi 0, %s146
      %s163 = sphi 0, %s147
      %s169 = sphi 0, %s171
      %s172 = sphi 0, %s169
      %s173 = sphi 0, %s172
      %s189 = sphi 0, %s173
      %s195 = sphi 0, %s197
      %s198 = sphi 0, %s195
      %s199 = sphi 0, %s198
      %s215 = sphi 0, %s199
      %s221 = sphi 0, %s223
      %s224 = sphi 0, %s221
      %s225 = sphi 0, %s224
      %s241 = sphi 0, %s225
      %s247 = sphi 0, %s249
      %s250 = sphi 0, %s247
      %s251 = sphi 0, %s250
      %s267 = sphi 0, %s251
      %s273 = sphi 0, %s275
      %s276 = sphi 0, %s273
      %s277 = sphi 0, %s276
      %s293 = sphi 0, %s277
      %s299 = sphi 0, %s301
      %s302 = sphi 0, %s299
      %s303 = sphi 0, %s302
      %s319 = sphi 0, %s303
      %s325 = sphi 0, %s327
      %s328 = sphi 0, %s325
      %s329 = sphi 0, %s328
      %s345 = sphi 0, %s329
      %s351 = sphi 0, %s353
      %s354 = sphi 0, %s351
      %s355 = sphi 0, %s354
      %s371 = sphi 0, %s355
      %s377 = sphi 0, %s379
      %s380 = sphi 0, %s377
      %s381 = sphi 0, %s380
      %s397 = sphi 0, %s381
      %s403 = sphi 0, %s405
      %s406 = sphi 0, %s403
      %s407 = sphi 0, %s406
      %s423 = sphi 0, %s407
    $region4: #{tpu_custom_call.1} parent=1 // loop_header_branch
      %46 = sbr.rel (%p44) target = $region8
    $region5: #{tpu_custom_call.1} parent=1 // loop_body
      %s48 = ssub.s32 %s43, 1
      %s49 = ssub.s32 %s43, 2
      %s56 = sadd.s32 1, %s51
      %p57 = scmp.ge.s32.totalorder %s56, 2
      %s58 = scalar_select %p57, 0, %s56
      %s59 = sadd.s32 1, %s50
      %s60 = scalar_select %p57, %s59, %s50
      %p61 = scmp.ge.s32.totalorder %s60, 2
      %s62 = scalar_select %p61, 0, %s60
      %s63 = ssub.s32 %s50, %s62
      %p64 = scmp.eq.s32.totalorder %s63, 0
      %s66 = sadd.s32 %s65, 1
      %s67 = scalar_select %p64, %s65, %s66
      %p70 = pneg %p64
      %p71 = scmp.eq.s32.totalorder %s43, 3
      %p72 = por %p70, %p71
      %p73 = scmp.ne.s32.totalorder %s65, %s68
      %p74 = scmp.eq.s32.totalorder %s43, 0
      %p75 = por %p73, %p74
      %p76 = scmp.ne.s32.totalorder %s65, %s68
      %p77 = scmp.eq.s32.totalorder %s48, 3
      %p78 = por %p76, %p77
      %p79 = scmp.ne.s32.totalorder %s68, %s69
      %p80 = scmp.eq.s32.totalorder %s48, 0
      %p81 = por %p79, %p80
      %p82 = scmp.ne.s32.totalorder %s68, %s69
      %p83 = scmp.eq.s32.totalorder %s49, 3
      %p84 = por %p82, %p83
      %p86 = scmp.ne.s32.totalorder %s69, %s85
      %p87 = scmp.eq.s32.totalorder %s49, 0
      %p88 = por %p86, %p87
      %s89 = ssub.s32 %s51, %s58
      %p90 = scmp.eq.s32.totalorder %s89, 0
      %s92 = sadd.s32 %s91, 1
      %s93 = scalar_select %p90, %s91, %s92
      %p96 = pneg %p90
      %p97 = scmp.eq.s32.totalorder %s43, 3
      %p98 = por %p96, %p97
      %p99 = scmp.ne.s32.totalorder %s91, %s94
      %p100 = scmp.eq.s32.totalorder %s43, 0
      %p101 = por %p99, %p100
      %p102 = scmp.ne.s32.totalorder %s91, %s94
      %p103 = scmp.eq.s32.totalorder %s48, 3
      %p104 = por %p102, %p103
      %p105 = scmp.ne.s32.totalorder %s94, %s95
      %p106 = scmp.eq.s32.totalorder %s48, 0
      %p107 = por %p105, %p106
      %p108 = scmp.ne.s32.totalorder %s94, %s95
      %p109 = scmp.eq.s32.totalorder %s49, 3
      %p110 = por %p108, %p109
      %p112 = scmp.ne.s32.totalorder %s95, %s111
      %p113 = scmp.eq.s32.totalorder %s49, 0
      %p114 = por %p112, %p113
      %s115 = ssub.s32 %s51, %s58
      %p116 = scmp.eq.s32.totalorder %s115, 0
      %s118 = sadd.s32 %s117, 1
      %s119 = scalar_select %p116, %s117, %s118
      %p122 = pneg %p116
      %p123 = scmp.eq.s32.totalorder %s43, 3
      %p124 = por %p122, %p123
      %p125 = scmp.ne.s32.totalorder %s117, %s120
      %p126 = scmp.eq.s32.totalorder %s43, 0
      %p127 = por %p125, %p126
      %p128 = scmp.ne.s32.totalorder %s117, %s120
      %p129 = scmp.eq.s32.totalorder %s48, 3
      %p130 = por %p128, %p129
      %p131 = scmp.ne.s32.totalorder %s120, %s121
      %p132 = scmp.eq.s32.totalorder %s48, 0
      %p133 = por %p131, %p132
      %p134 = scmp.ne.s32.totalorder %s120, %s121
      %p135 = scmp.eq.s32.totalorder %s49, 3
      %p136 = por %p134, %p135
      %p138 = scmp.ne.s32.totalorder %s121, %s137
      %p139 = scmp.eq.s32.totalorder %s49, 0
      %p140 = por %p138, %p139
      %s141 = ssub.s32 %s51, %s58
      %p142 = scmp.eq.s32.totalorder %s141, 0
      %s144 = sadd.s32 %s143, 1
      %s145 = scalar_select %p142, %s143, %s144
      %p148 = pneg %p142
      %p149 = scmp.eq.s32.totalorder %s43, 3
      %p150 = por %p148, %p149
      %p151 = scmp.ne.s32.totalorder %s143, %s146
      %p152 = scmp.eq.s32.totalorder %s43, 0
      %p153 = por %p151, %p152
      %p154 = scmp.ne.s32.totalorder %s143, %s146
      %p155 = scmp.eq.s32.totalorder %s48, 3
      %p156 = por %p154, %p155
      %p157 = scmp.ne.s32.totalorder %s146, %s147
      %p158 = scmp.eq.s32.totalorder %s48, 0
      %p159 = por %p157, %p158
      %p160 = scmp.ne.s32.totalorder %s146, %s147
      %p161 = scmp.eq.s32.totalorder %s49, 3
      %p162 = por %p160, %p161
      %p164 = scmp.ne.s32.totalorder %s147, %s163
      %p165 = scmp.eq.s32.totalorder %s49, 0
      %p166 = por %p164, %p165
      %s167 = ssub.s32 %s51, %s58
      %p168 = scmp.eq.s32.totalorder %s167, 0
      %s170 = sadd.s32 %s169, 1
      %s171 = scalar_select %p168, %s169, %s170
      %p174 = pneg %p168
      %p175 = scmp.eq.s32.totalorder %s43, 3
      %p176 = por %p174, %p175
      %p177 = scmp.ne.s32.totalorder %s169, %s172
      %p178 = scmp.eq.s32.totalorder %s43, 0
      %p179 = por %p177, %p178
      %p180 = scmp.ne.s32.totalorder %s169, %s172
      %p181 = scmp.eq.s32.totalorder %s48, 3
      %p182 = por %p180, %p181
      %p183 = scmp.ne.s32.totalorder %s172, %s173
      %p184 = scmp.eq.s32.totalorder %s48, 0
      %p185 = por %p183, %p184
      %p186 = scmp.ne.s32.totalorder %s172, %s173
      %p187 = scmp.eq.s32.totalorder %s49, 3
      %p188 = por %p186, %p187
      %p190 = scmp.ne.s32.totalorder %s173, %s189
      %p191 = scmp.eq.s32.totalorder %s49, 0
      %p192 = por %p190, %p191
      %s193 = ssub.s32 %s51, %s58
      %p194 = scmp.eq.s32.totalorder %s193, 0
      %s196 = sadd.s32 %s195, 1
      %s197 = scalar_select %p194, %s195, %s196
      %p200 = pneg %p194
      %p201 = scmp.eq.s32.totalorder %s43, 3
      %p202 = por %p200, %p201
      %p203 = scmp.ne.s32.totalorder %s195, %s198
      %p204 = scmp.eq.s32.totalorder %s43, 0
      %p205 = por %p203, %p204
      %p206 = scmp.ne.s32.totalorder %s195, %s198
      %p207 = scmp.eq.s32.totalorder %s48, 3
      %p208 = por %p206, %p207
      %p209 = scmp.ne.s32.totalorder %s198, %s199
      %p210 = scmp.eq.s32.totalorder %s48, 0
      %p211 = por %p209, %p210
      %p212 = scmp.ne.s32.totalorder %s198, %s199
      %p213 = scmp.eq.s32.totalorder %s49, 3
      %p214 = por %p212, %p213
      %p216 = scmp.ne.s32.totalorder %s199, %s215
      %p217 = scmp.eq.s32.totalorder %s49, 0
      %p218 = por %p216, %p217
      %s219 = ssub.s32 %s51, %s58
      %p220 = scmp.eq.s32.totalorder %s219, 0
      %s222 = sadd.s32 %s221, 1
      %s223 = scalar_select %p220, %s221, %s222
      %p226 = pneg %p220
      %p227 = scmp.eq.s32.totalorder %s43, 3
      %p228 = por %p226, %p227
      %p229 = scmp.ne.s32.totalorder %s221, %s224
      %p230 = scmp.eq.s32.totalorder %s43, 0
      %p231 = por %p229, %p230
      %p232 = scmp.ne.s32.totalorder %s221, %s224
      %p233 = scmp.eq.s32.totalorder %s48, 3
      %p234 = por %p232, %p233
      %p235 = scmp.ne.s32.totalorder %s224, %s225
      %p236 = scmp.eq.s32.totalorder %s48, 0
      %p237 = por %p235, %p236
      %p238 = scmp.ne.s32.totalorder %s224, %s225
      %p239 = scmp.eq.s32.totalorder %s49, 3
      %p240 = por %p238, %p239
      %p242 = scmp.ne.s32.totalorder %s225, %s241
      %p243 = scmp.eq.s32.totalorder %s49, 0
      %p244 = por %p242, %p243
      %s245 = ssub.s32 %s51, %s58
      %p246 = scmp.eq.s32.totalorder %s245, 0
      %s248 = sadd.s32 %s247, 1
      %s249 = scalar_select %p246, %s247, %s248
      %p252 = pneg %p246
      %p253 = scmp.eq.s32.totalorder %s43, 3
      %p254 = por %p252, %p253
      %p255 = scmp.ne.s32.totalorder %s247, %s250
      %p256 = scmp.eq.s32.totalorder %s43, 0
      %p257 = por %p255, %p256
      %p258 = scmp.ne.s32.totalorder %s247, %s250
      %p259 = scmp.eq.s32.totalorder %s48, 3
      %p260 = por %p258, %p259
      %p261 = scmp.ne.s32.totalorder %s250, %s251
      %p262 = scmp.eq.s32.totalorder %s48, 0
      %p263 = por %p261, %p262
      %p264 = scmp.ne.s32.totalorder %s250, %s251
      %p265 = scmp.eq.s32.totalorder %s49, 3
      %p266 = por %p264, %p265
      %p268 = scmp.ne.s32.totalorder %s251, %s267
      %p269 = scmp.eq.s32.totalorder %s49, 0
      %p270 = por %p268, %p269
      %s271 = ssub.s32 %s51, %s58
      %p272 = scmp.eq.s32.totalorder %s271, 0
      %s274 = sadd.s32 %s273, 1
      %s275 = scalar_select %p272, %s273, %s274
      %p278 = pneg %p272
      %p279 = scmp.eq.s32.totalorder %s43, 3
      %p280 = por %p278, %p279
      %p281 = scmp.ne.s32.totalorder %s273, %s276
      %p282 = scmp.eq.s32.totalorder %s43, 0
      %p283 = por %p281, %p282
      %p284 = scmp.ne.s32.totalorder %s273, %s276
      %p285 = scmp.eq.s32.totalorder %s48, 3
      %p286 = por %p284, %p285
      %p287 = scmp.ne.s32.totalorder %s276, %s277
      %p288 = scmp.eq.s32.totalorder %s48, 0
      %p289 = por %p287, %p288
      %p290 = scmp.ne.s32.totalorder %s276, %s277
      %p291 = scmp.eq.s32.totalorder %s49, 3
      %p292 = por %p290, %p291
      %p294 = scmp.ne.s32.totalorder %s277, %s293
      %p295 = scmp.eq.s32.totalorder %s49, 0
      %p296 = por %p294, %p295
      %s297 = ssub.s32 %s51, %s58
      %p298 = scmp.eq.s32.totalorder %s297, 0
      %s300 = sadd.s32 %s299, 1
      %s301 = scalar_select %p298, %s299, %s300
      %p304 = pneg %p298
      %p305 = scmp.eq.s32.totalorder %s43, 3
      %p306 = por %p304, %p305
      %p307 = scmp.ne.s32.totalorder %s299, %s302
      %p308 = scmp.eq.s32.totalorder %s43, 0
      %p309 = por %p307, %p308
      %p310 = scmp.ne.s32.totalorder %s299, %s302
      %p311 = scmp.eq.s32.totalorder %s48, 3
      %p312 = por %p310, %p311
      %p313 = scmp.ne.s32.totalorder %s302, %s303
      %p314 = scmp.eq.s32.totalorder %s48, 0
      %p315 = por %p313, %p314
      %p316 = scmp.ne.s32.totalorder %s302, %s303
      %p317 = scmp.eq.s32.totalorder %s49, 3
      %p318 = por %p316, %p317
      %p320 = scmp.ne.s32.totalorder %s303, %s319
      %p321 = scmp.eq.s32.totalorder %s49, 0
      %p322 = por %p320, %p321
      %s323 = ssub.s32 %s51, %s58
      %p324 = scmp.eq.s32.totalorder %s323, 0
      %s326 = sadd.s32 %s325, 1
      %s327 = scalar_select %p324, %s325, %s326
      %p330 = pneg %p324
      %p331 = scmp.eq.s32.totalorder %s43, 3
      %p332 = por %p330, %p331
      %p333 = scmp.ne.s32.totalorder %s325, %s328
      %p334 = scmp.eq.s32.totalorder %s43, 0
      %p335 = por %p333, %p334
      %p336 = scmp.ne.s32.totalorder %s325, %s328
      %p337 = scmp.eq.s32.totalorder %s48, 3
      %p338 = por %p336, %p337
      %p339 = scmp.ne.s32.totalorder %s328, %s329
      %p340 = scmp.eq.s32.totalorder %s48, 0
      %p341 = por %p339, %p340
      %p342 = scmp.ne.s32.totalorder %s328, %s329
      %p343 = scmp.eq.s32.totalorder %s49, 3
      %p344 = por %p342, %p343
      %p346 = scmp.ne.s32.totalorder %s329, %s345
      %p347 = scmp.eq.s32.totalorder %s49, 0
      %p348 = por %p346, %p347
      %s349 = ssub.s32 %s51, %s58
      %p350 = scmp.eq.s32.totalorder %s349, 0
      %s352 = sadd.s32 %s351, 1
      %s353 = scalar_select %p350, %s351, %s352
      %p356 = pneg %p350
      %p357 = scmp.eq.s32.totalorder %s43, 3
      %p358 = por %p356, %p357
      %p359 = scmp.ne.s32.totalorder %s351, %s354
      %p360 = scmp.eq.s32.totalorder %s43, 0
      %p361 = por %p359, %p360
      %p362 = scmp.ne.s32.totalorder %s351, %s354
      %p363 = scmp.eq.s32.totalorder %s48, 3
      %p364 = por %p362, %p363
      %p365 = scmp.ne.s32.totalorder %s354, %s355
      %p366 = scmp.eq.s32.totalorder %s48, 0
      %p367 = por %p365, %p366
      %p368 = scmp.ne.s32.totalorder %s354, %s355
      %p369 = scmp.eq.s32.totalorder %s49, 3
      %p370 = por %p368, %p369
      %p372 = scmp.ne.s32.totalorder %s355, %s371
      %p373 = scmp.eq.s32.totalorder %s49, 0
      %p374 = por %p372, %p373
      %s375 = ssub.s32 %s51, %s58
      %p376 = scmp.eq.s32.totalorder %s375, 0
      %s378 = sadd.s32 %s377, 1
      %s379 = scalar_select %p376, %s377, %s378
      %p382 = pneg %p376
      %p383 = scmp.eq.s32.totalorder %s43, 3
      %p384 = por %p382, %p383
      %p385 = scmp.ne.s32.totalorder %s377, %s380
      %p386 = scmp.eq.s32.totalorder %s43, 0
      %p387 = por %p385, %p386
      %p388 = scmp.ne.s32.totalorder %s377, %s380
      %p389 = scmp.eq.s32.totalorder %s48, 3
      %p390 = por %p388, %p389
      %p391 = scmp.ne.s32.totalorder %s380, %s381
      %p392 = scmp.eq.s32.totalorder %s48, 0
      %p393 = por %p391, %p392
      %p394 = scmp.ne.s32.totalorder %s380, %s381
      %p395 = scmp.eq.s32.totalorder %s49, 3
      %p396 = por %p394, %p395
      %p398 = scmp.ne.s32.totalorder %s381, %s397
      %p399 = scmp.eq.s32.totalorder %s49, 0
      %p400 = por %p398, %p399
      %s401 = ssub.s32 %s50, %s62
      %p402 = scmp.eq.s32.totalorder %s401, 0
      %s404 = sadd.s32 %s403, 1
      %s405 = scalar_select %p402, %s403, %s404
      %p408 = pneg %p402
      %p409 = scmp.eq.s32.totalorder %s43, 3
      %p410 = por %p408, %p409
      %p411 = scmp.ne.s32.totalorder %s403, %s406
      %p412 = scmp.eq.s32.totalorder %s43, 0
      %p413 = por %p411, %p412
      %p414 = scmp.ne.s32.totalorder %s403, %s406
      %p415 = scmp.eq.s32.totalorder %s48, 3
      %p416 = por %p414, %p415
      %p417 = scmp.ne.s32.totalorder %s406, %s407
      %p418 = scmp.eq.s32.totalorder %s48, 0
      %p419 = por %p417, %p418
      %p420 = scmp.ne.s32.totalorder %s406, %s407
      %p421 = scmp.eq.s32.totalorder %s49, 3
      %p422 = por %p420, %p421
      %p424 = scmp.ne.s32.totalorder %s407, %s423
      %p425 = scmp.eq.s32.totalorder %s49, 0
      %p426 = por %p424, %p425
      %p427 = scmp.le.s32.totalorder 1, %s43
      %p428 = scmp.lt.s32.totalorder %s43, 5
      %p429 = pnand %p427, %p428
      %p430 = pneg %p429
      // Predicated region
      $region9: #{tpu_custom_call.1} parent=5 // pred_check
        _
      $region10: #{tpu_custom_call.1} parent=5 // pred_check_branch
        %432 = sbr.rel (%p429) target = $region12
      $region11: #{tpu_custom_call.1} parent=5 // pred_region
        %s433 = ssub.s32 %s43, 1
      $region12: #{tpu_custom_call.1} parent=5 // pred_fallthru
        _
      %p434 = scmp.lt.s32.totalorder %s43, 4
      // Predicated region
      $region13: #{tpu_custom_call.1} parent=5 // pred_check
        %p435 = pneg %p434
      $region14: #{tpu_custom_call.1} parent=5 // pred_check_branch
        %437 = sbr.rel (%p435) target = $region16
      $region15: #{tpu_custom_call.1} parent=5 // pred_region
        // Predicated region
        $region17: #{tpu_custom_call.1} parent=15 // pred_check
          %p438 = pneg %p75
        $region18: #{tpu_custom_call.1} parent=15 // pred_check_branch
          %440 = sbr.rel (%p438) target = $region20
        $region19: #{tpu_custom_call.1} parent=15 // pred_region
          %s441 = sand.u32 %s65, 1
          %s442 = scalar_lea.sflag [#allocation3], %s441
          %s443 = sand.u32 %s65, 1
          %s444 = smul.addr %s443, 8
          %s445 = scalar_lea.vmem [#allocation2], %s444
          %s447 = ssub.s32 128, 128
          %448 = vsyncadd %s442, %s447
          %s449 = smul.addr %s50, 128
          %s450 = scalar_lea.hbm %s0, %s449
          %s452 = sshll.u32 %s445, 4
          %s453 = int_to_ptr.vmem [resolvable:$true] %s452
          %455 = dma.hbm_to_vmem [thread:$0]  %s450, 128, %s453, %s442
        $region20: #{tpu_custom_call.1} parent=15 // pred_fallthru
          _
        // Predicated region
        $region21: #{tpu_custom_call.1} parent=15 // pred_check
          %p456 = pneg %p101
        $region22: #{tpu_custom_call.1} parent=15 // pred_check_branch
          %458 = sbr.rel (%p456) target = $region24
        $region23: #{tpu_custom_call.1} parent=15 // pred_region
          %s459 = sand.u32 %s43, 1
          %s460 = scalar_lea.sflag [#allocation6], %s459
          %s461 = sand.u32 %s91, 1
          %s462 = smul.addr %s461, 64
          %s463 = scalar_lea.vmem [#allocation5], %s462
          %s465 = ssub.s32 1024, 1024
          %466 = vsyncadd %s460, %s465
          %s467 = smul.addr %s51, 16
          %s468 = smul.addr %s467, 64
          %s469 = scalar_lea.hbm %s1, %s468
          %s470 = sshll.u32 %s463, 4
          %s471 = int_to_ptr.vmem [resolvable:$true] %s470
          %476 = dma.hbm_to_vmem [thread:$0]  %s469, 1024, %s471, %s460, 64, 64, 4
        $region24: #{tpu_custom_call.1} parent=15 // pred_fallthru
          _
        // Predicated region
        $region25: #{tpu_custom_call.1} parent=15 // pred_check
          %p477 = pneg %p127
        $region26: #{tpu_custom_call.1} parent=15 // pred_check_branch
          %479 = sbr.rel (%p477) target = $region28
        $region27: #{tpu_custom_call.1} parent=15 // pred_region
          %s480 = sand.u32 %s43, 1
          %s481 = scalar_lea.sflag [#allocation6], %s480
          %s482 = sand.u32 %s117, 1
          %s483 = smul.addr %s482, 4
          %s484 = scalar_lea.vmem [#allocation7], %s483
          %s486 = ssub.s32 64, 64
          %487 = vsyncadd %s481, %s486
          %s488 = smul.addr %s51, 4
          %s489 = smul.addr %s488, 16
          %s490 = scalar_lea.hbm %s2, %s489
          %s491 = sshll.u32 %s484, 4
          %s492 = int_to_ptr.vmem [resolvable:$true] %s491
          %497 = dma.hbm_to_vmem [thread:$0]  %s490, 64, %s492, %s481, 16, 16, 1
        $region28: #{tpu_custom_call.1} parent=15 // pred_fallthru
          _
        // Predicated region
        $region29: #{tpu_custom_call.1} parent=15 // pred_check
          %p498 = pneg %p153
        $region30: #{tpu_custom_call.1} parent=15 // pred_check_branch
          %500 = sbr.rel (%p498) target = $region32
        $region31: #{tpu_custom_call.1} parent=15 // pred_region
          %s501 = sand.u32 %s43, 1
          %s502 = scalar_lea.sflag [#allocation9], %s501
          %s503 = sand.u32 %s143, 1
          %s504 = smul.addr %s503, 16
          %s505 = scalar_lea.vmem [#allocation8], %s504
          %s507 = ssub.s32 256, 256
          %508 = vsyncadd %s502, %s507
          %s509 = smul.addr %s51, 4
          %s510 = smul.addr %s509, 64
          %s511 = scalar_lea.hbm %s3, %s510
          %s512 = sshll.u32 %s505, 4
          %s513 = int_to_ptr.vmem [resolvable:$true] %s512
          %518 = dma.hbm_to_vmem [thread:$0]  %s511, 256, %s513, %s502, 64, 64, 4
        $region32: #{tpu_custom_call.1} parent=15 // pred_fallthru
          _
        // Predicated region
        $region33: #{tpu_custom_call.1} parent=15 // pred_check
          %p519 = pneg %p179
        $region34: #{tpu_custom_call.1} parent=15 // pred_check_branch
          %521 = sbr.rel (%p519) target = $region36
        $region35: #{tpu_custom_call.1} parent=15 // pred_region
          %s522 = sand.u32 %s43, 1
          %s523 = scalar_lea.sflag [#allocation9], %s522
          %s524 = sand.u32 %s169, 1
          %s525 = scalar_lea.vmem [#allocation10], %s524
          %s527 = ssub.s32 16, 16
          %528 = vsyncadd %s523, %s527
          %s529 = smul.addr %s51, 16
          %s530 = scalar_lea.hbm %s4, %s529
          %s532 = sshll.u32 %s525, 4
          %s533 = int_to_ptr.vmem [resolvable:$true] %s532
          %535 = dma.hbm_to_vmem [thread:$0]  %s530, 16, %s533, %s523
        $region36: #{tpu_custom_call.1} parent=15 // pred_fallthru
          _
        // Predicated region
        $region37: #{tpu_custom_call.1} parent=15 // pred_check
          %p536 = pneg %p205
        $region38: #{tpu_custom_call.1} parent=15 // pred_check_branch
          %538 = sbr.rel (%p536) target = $region40
        $region39: #{tpu_custom_call.1} parent=15 // pred_region
          %s539 = sand.u32 %s43, 1
          %s540 = scalar_lea.sflag [#allocation12], %s539
          %s541 = sand.u32 %s195, 1
          %s542 = scalar_lea.vmem [#allocation11], %s541
          %s544 = ssub.s32 16, 16
          %545 = vsyncadd %s540, %s544
          %s546 = smul.addr %s51, 16
          %s547 = scalar_lea.hbm %s5, %s546
          %s549 = sshll.u32 %s542, 4
          %s550 = int_to_ptr.vmem [resolvable:$true] %s549
          %552 = dma.hbm_to_vmem [thread:$0]  %s547, 16, %s550, %s540
        $region40: #{tpu_custom_call.1} parent=15 // pred_fallthru
          _
        // Predicated region
        $region41: #{tpu_custom_call.1} parent=15 // pred_check
          %p553 = pneg %p231
        $region42: #{tpu_custom_call.1} parent=15 // pred_check_branch
          %555 = sbr.rel (%p553) target = $region44
        $region43: #{tpu_custom_call.1} parent=15 // pred_region
          %s556 = sand.u32 %s43, 1
          %s557 = scalar_lea.sflag [#allocation12], %s556
          %s558 = sand.u32 %s221, 1
          %s559 = scalar_lea.vmem [#allocation13], %s558
          %s561 = ssub.s32 16, 16
          %562 = vsyncadd %s557, %s561
          %s563 = smul.addr %s51, 16
          %s564 = scalar_lea.hbm %s6, %s563
          %s566 = sshll.u32 %s559, 4
          %s567 = int_to_ptr.vmem [resolvable:$true] %s566
          %569 = dma.hbm_to_vmem [thread:$0]  %s564, 16, %s567, %s557
        $region44: #{tpu_custom_call.1} parent=15 // pred_fallthru
          _
        // Predicated region
        $region45: #{tpu_custom_call.1} parent=15 // pred_check
          %p570 = pneg %p257
        $region46: #{tpu_custom_call.1} parent=15 // pred_check_branch
          %572 = sbr.rel (%p570) target = $region48
        $region47: #{tpu_custom_call.1} parent=15 // pred_region
          %s573 = sand.u32 %s43, 1
          %s574 = scalar_lea.sflag [#allocation15], %s573
          %s575 = sand.u32 %s247, 1
          %s576 = smul.addr %s575, 16
          %s577 = scalar_lea.vmem [#allocation14], %s576
          %s579 = ssub.s32 256, 256
          %580 = vsyncadd %s574, %s579
          %s581 = smul.addr %s51, 4
          %s582 = smul.addr %s581, 64
          %s583 = scalar_lea.hbm %s7, %s582
          %s584 = sshll.u32 %s577, 4
          %s585 = int_to_ptr.vmem [resolvable:$true] %s584
          %590 = dma.hbm_to_vmem [thread:$0]  %s583, 256, %s585, %s574, 64, 64, 4
        $region48: #{tpu_custom_call.1} parent=15 // pred_fallthru
          _
        // Predicated region
        $region49: #{tpu_custom_call.1} parent=15 // pred_check
          %p591 = pneg %p283
        $region50: #{tpu_custom_call.1} parent=15 // pred_check_branch
          %593 = sbr.rel (%p591) target = $region52
        $region51: #{tpu_custom_call.1} parent=15 // pred_region
          %s594 = sand.u32 %s43, 1
          %s595 = scalar_lea.sflag [#allocation15], %s594
          %s596 = sand.u32 %s273, 1
          %s597 = scalar_lea.vmem [#allocation16], %s596
          %s599 = ssub.s32 16, 16
          %600 = vsyncadd %s595, %s599
          %s601 = smul.addr %s51, 16
          %s602 = scalar_lea.hbm %s8, %s601
          %s604 = sshll.u32 %s597, 4
          %s605 = int_to_ptr.vmem [resolvable:$true] %s604
          %607 = dma.hbm_to_vmem [thread:$0]  %s602, 16, %s605, %s595
        $region52: #{tpu_custom_call.1} parent=15 // pred_fallthru
          _
        // Predicated region
        $region53: #{tpu_custom_call.1} parent=15 // pred_check
          %p608 = pneg %p309
        $region54: #{tpu_custom_call.1} parent=15 // pred_check_branch
          %610 = sbr.rel (%p608) target = $region56
        $region55: #{tpu_custom_call.1} parent=15 // pred_region
          %s611 = sand.u32 %s43, 1
          %s612 = scalar_lea.sflag [#allocation18], %s611
          %s613 = sand.u32 %s299, 1
          %s614 = smul.addr %s613, 64
          %s615 = scalar_lea.vmem [#allocation17], %s614
          %s617 = ssub.s32 1024, 1024
          %618 = vsyncadd %s612, %s617
          %s619 = smul.addr %s51, 16
          %s620 = smul.addr %s619, 64
          %s621 = scalar_lea.hbm %s9, %s620
          %s622 = sshll.u32 %s615, 4
          %s623 = int_to_ptr.vmem [resolvable:$true] %s622
          %628 = dma.hbm_to_vmem [thread:$0]  %s621, 1024, %s623, %s612, 64, 64, 4
        $region56: #{tpu_custom_call.1} parent=15 // pred_fallthru
          _
        // Predicated region
        $region57: #{tpu_custom_call.1} parent=15 // pred_check
          %p629 = pneg %p335
        $region58: #{tpu_custom_call.1} parent=15 // pred_check_branch
          %631 = sbr.rel (%p629) target = $region60
        $region59: #{tpu_custom_call.1} parent=15 // pred_region
          %s632 = sand.u32 %s43, 1
          %s633 = scalar_lea.sflag [#allocation18], %s632
          %s634 = sand.u32 %s325, 1
          %s635 = scalar_lea.vmem [#allocation19], %s634
          %s637 = ssub.s32 16, 16
          %638 = vsyncadd %s633, %s637
          %s639 = smul.addr %s51, 16
          %s640 = scalar_lea.hbm %s10, %s639
          %s642 = sshll.u32 %s635, 4
          %s643 = int_to_ptr.vmem [resolvable:$true] %s642
          %645 = dma.hbm_to_vmem [thread:$0]  %s640, 16, %s643, %s633
        $region60: #{tpu_custom_call.1} parent=15 // pred_fallthru
          _
        // Predicated region
        $region61: #{tpu_custom_call.1} parent=15 // pred_check
          %p646 = pneg %p361
        $region62: #{tpu_custom_call.1} parent=15 // pred_check_branch
          %648 = sbr.rel (%p646) target = $region64
        $region63: #{tpu_custom_call.1} parent=15 // pred_region
          %s649 = sand.u32 %s43, 1
          %s650 = scalar_lea.sflag [#allocation21], %s649
          %s651 = sand.u32 %s351, 1
          %s652 = scalar_lea.vmem [#allocation20], %s651
          %s654 = ssub.s32 16, 16
          %655 = vsyncadd %s650, %s654
          %s656 = smul.addr %s51, 16
          %s657 = scalar_lea.hbm %s11, %s656
          %s659 = sshll.u32 %s652, 4
          %s660 = int_to_ptr.vmem [resolvable:$true] %s659
          %662 = dma.hbm_to_vmem [thread:$0]  %s657, 16, %s660, %s650
        $region64: #{tpu_custom_call.1} parent=15 // pred_fallthru
          _
        // Predicated region
        $region65: #{tpu_custom_call.1} parent=15 // pred_check
          %p663 = pneg %p387
        $region66: #{tpu_custom_call.1} parent=15 // pred_check_branch
          %665 = sbr.rel (%p663) target = $region68
        $region67: #{tpu_custom_call.1} parent=15 // pred_region
          %s666 = sand.u32 %s43, 1
          %s667 = scalar_lea.sflag [#allocation21], %s666
          %s668 = sand.u32 %s377, 1
          %s669 = scalar_lea.vmem [#allocation22], %s668
          %s671 = ssub.s32 16, 16
          %672 = vsyncadd %s667, %s671
          %s673 = smul.addr %s51, 16
          %s674 = scalar_lea.hbm %s12, %s673
          %s676 = sshll.u32 %s669, 4
          %s677 = int_to_ptr.vmem [resolvable:$true] %s676
          %679 = dma.hbm_to_vmem [thread:$0]  %s674, 16, %s677, %s667
        $region68: #{tpu_custom_call.1} parent=15 // pred_fallthru
          _
      $region16: #{tpu_custom_call.1} parent=5 // pred_fallthru
        _
      %p680 = scmp.le.s32.totalorder 1, %s43
      %p681 = scmp.lt.s32.totalorder %s43, 5
      %p682 = pnand %p680, %p681
      %p683 = pneg %p682
      // Predicated region
      $region69: #{tpu_custom_call.1} parent=5 // pred_check
        _
      $region70: #{tpu_custom_call.1} parent=5 // pred_check_branch
        %685 = sbr.rel (%p682) target = $region72
      $region71: #{tpu_custom_call.1} parent=5 // pred_region
        %s686 = ssub.s32 %s43, 1
        %s687 = sand.u32 %s68, 1
        %s688 = scalar_lea.sflag [#allocation3], %s687
        %s689 = sand.u32 %s68, 1
        %s690 = smul.addr %s689, 8
        %s691 = scalar_lea.vmem [#allocation2], %s690
        // Predicated region
        $region73: #{tpu_custom_call.1} parent=71 // pred_check
          %p692 = pneg %p81
        $region74: #{tpu_custom_call.1} parent=71 // pred_check_branch
          %694 = sbr.rel (%p692) target = $region76
        $region75: #{tpu_custom_call.1} parent=71 // pred_region
          %695 = dma.done %s688, 128
        $region76: #{tpu_custom_call.1} parent=71 // pred_fallthru
          _
        %s696 = sand.u32 %s48, 1
        %s697 = scalar_lea.sflag [#allocation6], %s696
        %s698 = sand.u32 %s94, 1
        %s699 = smul.addr %s698, 64
        %s700 = scalar_lea.vmem [#allocation5], %s699
        // Predicated region
        $region77: #{tpu_custom_call.1} parent=71 // pred_check
          %p701 = pneg %p107
        $region78: #{tpu_custom_call.1} parent=71 // pred_check_branch
          %703 = sbr.rel (%p701) target = $region80
        $region79: #{tpu_custom_call.1} parent=71 // pred_region
          %704 = dma.done %s697, 1024
        $region80: #{tpu_custom_call.1} parent=71 // pred_fallthru
          _
        %s705 = sand.u32 %s48, 1
        %s706 = scalar_lea.sflag [#allocation6], %s705
        %s707 = sand.u32 %s120, 1
        %s708 = smul.addr %s707, 4
        %s709 = scalar_lea.vmem [#allocation7], %s708
        // Predicated region
        $region81: #{tpu_custom_call.1} parent=71 // pred_check
          %p710 = pneg %p133
        $region82: #{tpu_custom_call.1} parent=71 // pred_check_branch
          %712 = sbr.rel (%p710) target = $region84
        $region83: #{tpu_custom_call.1} parent=71 // pred_region
          %713 = dma.done %s706, 64
        $region84: #{tpu_custom_call.1} parent=71 // pred_fallthru
          _
        %s714 = sand.u32 %s48, 1
        %s715 = scalar_lea.sflag [#allocation9], %s714
        %s716 = sand.u32 %s146, 1
        %s717 = smul.addr %s716, 16
        %s718 = scalar_lea.vmem [#allocation8], %s717
        // Predicated region
        $region85: #{tpu_custom_call.1} parent=71 // pred_check
          %p719 = pneg %p159
        $region86: #{tpu_custom_call.1} parent=71 // pred_check_branch
          %721 = sbr.rel (%p719) target = $region88
        $region87: #{tpu_custom_call.1} parent=71 // pred_region
          %722 = dma.done %s715, 256
        $region88: #{tpu_custom_call.1} parent=71 // pred_fallthru
          _
        %s723 = sand.u32 %s48, 1
        %s724 = scalar_lea.sflag [#allocation9], %s723
        %s725 = sand.u32 %s172, 1
        %s726 = scalar_lea.vmem [#allocation10], %s725
        // Predicated region
        $region89: #{tpu_custom_call.1} parent=71 // pred_check
          %p727 = pneg %p185
        $region90: #{tpu_custom_call.1} parent=71 // pred_check_branch
          %729 = sbr.rel (%p727) target = $region92
        $region91: #{tpu_custom_call.1} parent=71 // pred_region
          %730 = dma.done %s724, 16
        $region92: #{tpu_custom_call.1} parent=71 // pred_fallthru
          _
        %s731 = sand.u32 %s48, 1
        %s732 = scalar_lea.sflag [#allocation12], %s731
        %s733 = sand.u32 %s198, 1
        %s734 = scalar_lea.vmem [#allocation11], %s733
        // Predicated region
        $region93: #{tpu_custom_call.1} parent=71 // pred_check
          %p735 = pneg %p211
        $region94: #{tpu_custom_call.1} parent=71 // pred_check_branch
          %737 = sbr.rel (%p735) target = $region96
        $region95: #{tpu_custom_call.1} parent=71 // pred_region
          %738 = dma.done %s732, 16
        $region96: #{tpu_custom_call.1} parent=71 // pred_fallthru
          _
        %s739 = sand.u32 %s48, 1
        %s740 = scalar_lea.sflag [#allocation12], %s739
        %s741 = sand.u32 %s224, 1
        %s742 = scalar_lea.vmem [#allocation13], %s741
        // Predicated region
        $region97: #{tpu_custom_call.1} parent=71 // pred_check
          %p743 = pneg %p237
        $region98: #{tpu_custom_call.1} parent=71 // pred_check_branch
          %745 = sbr.rel (%p743) target = $region100
        $region99: #{tpu_custom_call.1} parent=71 // pred_region
          %746 = dma.done %s740, 16
        $region100: #{tpu_custom_call.1} parent=71 // pred_fallthru
          _
        %s747 = sand.u32 %s48, 1
        %s748 = scalar_lea.sflag [#allocation15], %s747
        %s749 = sand.u32 %s250, 1
        %s750 = smul.addr %s749, 16
        %s751 = scalar_lea.vmem [#allocation14], %s750
        // Predicated region
        $region101: #{tpu_custom_call.1} parent=71 // pred_check
          %p752 = pneg %p263
        $region102: #{tpu_custom_call.1} parent=71 // pred_check_branch
          %754 = sbr.rel (%p752) target = $region104
        $region103: #{tpu_custom_call.1} parent=71 // pred_region
          %755 = dma.done %s748, 256
        $region104: #{tpu_custom_call.1} parent=71 // pred_fallthru
          _
        %s756 = sand.u32 %s48, 1
        %s757 = scalar_lea.sflag [#allocation15], %s756
        %s758 = sand.u32 %s276, 1
        %s759 = scalar_lea.vmem [#allocation16], %s758
        // Predicated region
        $region105: #{tpu_custom_call.1} parent=71 // pred_check
          %p760 = pneg %p289
        $region106: #{tpu_custom_call.1} parent=71 // pred_check_branch
          %762 = sbr.rel (%p760) target = $region108
        $region107: #{tpu_custom_call.1} parent=71 // pred_region
          %763 = dma.done %s757, 16
        $region108: #{tpu_custom_call.1} parent=71 // pred_fallthru
          _
        %s764 = sand.u32 %s48, 1
        %s765 = scalar_lea.sflag [#allocation18], %s764
        %s766 = sand.u32 %s302, 1
        %s767 = smul.addr %s766, 64
        %s768 = scalar_lea.vmem [#allocation17], %s767
        // Predicated region
        $region109: #{tpu_custom_call.1} parent=71 // pred_check
          %p769 = pneg %p315
        $region110: #{tpu_custom_call.1} parent=71 // pred_check_branch
          %771 = sbr.rel (%p769) target = $region112
        $region111: #{tpu_custom_call.1} parent=71 // pred_region
          %772 = dma.done %s765, 1024
        $region112: #{tpu_custom_call.1} parent=71 // pred_fallthru
          _
        %s773 = sand.u32 %s48, 1
        %s774 = scalar_lea.sflag [#allocation18], %s773
        %s775 = sand.u32 %s328, 1
        %s776 = scalar_lea.vmem [#allocation19], %s775
        // Predicated region
        $region113: #{tpu_custom_call.1} parent=71 // pred_check
          %p777 = pneg %p341
        $region114: #{tpu_custom_call.1} parent=71 // pred_check_branch
          %779 = sbr.rel (%p777) target = $region116
        $region115: #{tpu_custom_call.1} parent=71 // pred_region
          %780 = dma.done %s774, 16
        $region116: #{tpu_custom_call.1} parent=71 // pred_fallthru
          _
        %s781 = sand.u32 %s48, 1
        %s782 = scalar_lea.sflag [#allocation21], %s781
        %s783 = sand.u32 %s354, 1
        %s784 = scalar_lea.vmem [#allocation20], %s783
        // Predicated region
        $region117: #{tpu_custom_call.1} parent=71 // pred_check
          %p785 = pneg %p367
        $region118: #{tpu_custom_call.1} parent=71 // pred_check_branch
          %787 = sbr.rel (%p785) target = $region120
        $region119: #{tpu_custom_call.1} parent=71 // pred_region
          %788 = dma.done %s782, 16
        $region120: #{tpu_custom_call.1} parent=71 // pred_fallthru
          _
        %s789 = sand.u32 %s48, 1
        %s790 = scalar_lea.sflag [#allocation21], %s789
        %s791 = sand.u32 %s380, 1
        %s792 = scalar_lea.vmem [#allocation22], %s791
        // Predicated region
        $region121: #{tpu_custom_call.1} parent=71 // pred_check
          %p793 = pneg %p393
        $region122: #{tpu_custom_call.1} parent=71 // pred_check_branch
          %795 = sbr.rel (%p793) target = $region124
        $region123: #{tpu_custom_call.1} parent=71 // pred_region
          %796 = dma.done %s790, 16
        $region124: #{tpu_custom_call.1} parent=71 // pred_fallthru
          _
        %s797 = sand.u32 %s68, 1
        %s798 = scalar_lea.sflag [#allocation3], %s797
        %s799 = sand.u32 %s68, 1
        %s800 = smul.addr %s799, 8
        %s801 = scalar_lea.vmem [#allocation2], %s800
        %p802 = pneg %p81
        %p803 = pneg %p78
        %s804 = sand.u32 %s48, 1
        %s805 = scalar_lea.sflag [#allocation6], %s804
        %s806 = sand.u32 %s94, 1
        %s807 = smul.addr %s806, 64
        %s808 = scalar_lea.vmem [#allocation5], %s807
        %p809 = pneg %p107
        %p810 = pneg %p104
        %s811 = sand.u32 %s48, 1
        %s812 = scalar_lea.sflag [#allocation6], %s811
        %s813 = sand.u32 %s120, 1
        %s814 = smul.addr %s813, 4
        %s815 = scalar_lea.vmem [#allocation7], %s814
        %p816 = pneg %p133
        %p817 = pneg %p130
        %s818 = sand.u32 %s48, 1
        %s819 = scalar_lea.sflag [#allocation9], %s818
        %s820 = sand.u32 %s146, 1
        %s821 = smul.addr %s820, 16
        %s822 = scalar_lea.vmem [#allocation8], %s821
        %p823 = pneg %p159
        %p824 = pneg %p156
        %s825 = sand.u32 %s48, 1
        %s826 = scalar_lea.sflag [#allocation9], %s825
        %s827 = sand.u32 %s172, 1
        %s828 = scalar_lea.vmem [#allocation10], %s827
        %p829 = pneg %p185
        %p830 = pneg %p182
        %s831 = sand.u32 %s48, 1
        %s832 = scalar_lea.sflag [#allocation12], %s831
        %s833 = sand.u32 %s198, 1
        %s834 = scalar_lea.vmem [#allocation11], %s833
        %p835 = pneg %p211
        %p836 = pneg %p208
        %s837 = sand.u32 %s48, 1
        %s838 = scalar_lea.sflag [#allocation12], %s837
        %s839 = sand.u32 %s224, 1
        %s840 = scalar_lea.vmem [#allocation13], %s839
        %p841 = pneg %p237
        %p842 = pneg %p234
        %s843 = sand.u32 %s48, 1
        %s844 = scalar_lea.sflag [#allocation15], %s843
        %s845 = sand.u32 %s250, 1
        %s846 = smul.addr %s845, 16
        %s847 = scalar_lea.vmem [#allocation14], %s846
        %p848 = pneg %p263
        %p849 = pneg %p260
        %s850 = sand.u32 %s48, 1
        %s851 = scalar_lea.sflag [#allocation15], %s850
        %s852 = sand.u32 %s276, 1
        %s853 = scalar_lea.vmem [#allocation16], %s852
        %p854 = pneg %p289
        %p855 = pneg %p286
        %s856 = sand.u32 %s48, 1
        %s857 = scalar_lea.sflag [#allocation18], %s856
        %s858 = sand.u32 %s302, 1
        %s859 = smul.addr %s858, 64
        %s860 = scalar_lea.vmem [#allocation17], %s859
        %p861 = pneg %p315
        %p862 = pneg %p312
        %s863 = sand.u32 %s48, 1
        %s864 = scalar_lea.sflag [#allocation18], %s863
        %s865 = sand.u32 %s328, 1
        %s866 = scalar_lea.vmem [#allocation19], %s865
        %p867 = pneg %p341
        %p868 = pneg %p338
        %s869 = sand.u32 %s48, 1
        %s870 = scalar_lea.sflag [#allocation21], %s869
        %s871 = sand.u32 %s354, 1
        %s872 = scalar_lea.vmem [#allocation20], %s871
        %p873 = pneg %p367
        %p874 = pneg %p364
        %s875 = sand.u32 %s48, 1
        %s876 = scalar_lea.sflag [#allocation21], %s875
        %s877 = sand.u32 %s380, 1
        %s878 = scalar_lea.vmem [#allocation22], %s877
        %p879 = pneg %p393
        %p880 = pneg %p390
        %p881 = pneg %p419
        %p882 = pneg %p416
        %s883 = sand.u32 %s406, 1
        %s884 = scalar_lea.sflag [#allocation4], %s883
        %s885 = sand.u32 %s406, 1
        %s886 = smul.addr %s885, 8
        %s887 = scalar_lea.vmem [#allocation23], %s886
        %p889 = scmp.eq.s32.totalorder %s53, 0
        // Predicated region
        $region125: #{tpu_custom_call.1} parent=71 // pred_check
          %p890 = pneg %p889
        $region126: #{tpu_custom_call.1} parent=71 // pred_check_branch
          %892 = sbr.rel (%p890) target = $region128
        $region127: #{tpu_custom_call.1} parent=71 // pred_region
          %v893 = vld [vmem:[%s691] sm:$0xff]
          %vm894 = vcmask 261120
          %895 = vst.msk [vmem:[%s887] sm:$0xff] %vm894, %v893
        $region128: #{tpu_custom_call.1} parent=71 // pred_fallthru
          _
        %v896 = vld [vmem:[%s887] sm:$0xff]
        %v897 = vld [vmem:[%s700] sm:$0xf]
        %v898 = vld [vmem:[%s700 + $0x4] sm:$0xf]
        %v899 = vld [vmem:[%s700 + $0x8] sm:$0xf]
        %v900 = vld [vmem:[%s700 + $0xc] sm:$0xf]
        %v901 = vld [vmem:[%s700 + $0x10] sm:$0xf]
        %v902 = vld [vmem:[%s700 + $0x14] sm:$0xf]
        %v903 = vld [vmem:[%s700 + $0x18] sm:$0xf]
        %v904 = vld [vmem:[%s700 + $0x1c] sm:$0xf]
        %v905 = vld [vmem:[%s700 + $0x20] sm:$0xf]
        %v906 = vld [vmem:[%s700 + $0x24] sm:$0xf]
        %v907 = vld [vmem:[%s700 + $0x28] sm:$0xf]
        %v908 = vld [vmem:[%s700 + $0x2c] sm:$0xf]
        %v909 = vld [vmem:[%s700 + $0x30] sm:$0xf]
        %v910 = vld [vmem:[%s700 + $0x34] sm:$0xf]
        %v911 = vld [vmem:[%s700 + $0x38] sm:$0xf]
        %v912 = vld [vmem:[%s700 + $0x3c] sm:$0xf]
        %v913 = vld [vmem:[%s709] sm:$0x1]
        %v914 = vld [vmem:[%s709 + $0x1] sm:$0x1]
        %v915 = vld [vmem:[%s709 + $0x2] sm:$0x1]
        %v916 = vld [vmem:[%s709 + $0x3] sm:$0x1]
        %v917 = vld [vmem:[%s718] sm:$0xf]
        %v918 = vld [vmem:[%s718 + $0x4] sm:$0xf]
        %v919 = vld [vmem:[%s718 + $0x8] sm:$0xf]
        %v920 = vld [vmem:[%s718 + $0xc] sm:$0xf]
        %v921 = vld [vmem:[%s726] sm:$0x1]
        %v922 = vpack.c.bf16 %v896, %v896
        %v927 = vlaneseq
        %v928 = vshrl.u32 %v927, 7
        %v929 = vsub.s32 0, %v928
        %v930 = vrot.slane %v913, %v929
        %v931 = vlaneseq
        %v932 = vshrl.u32 %v931, 7
        %v933 = vsub.s32 0, %v932
        %v934 = vrot.slane %v914, %v933
        %v935 = vlaneseq
        %v936 = vshrl.u32 %v935, 7
        %v937 = vsub.s32 0, %v936
        %v938 = vrot.slane %v915, %v937
        %v939 = vlaneseq
        %v940 = vshrl.u32 %v939, 7
        %v941 = vsub.s32 0, %v940
        %v942 = vrot.slane %v916, %v941
        %v951 = vunpack.c.l.b16 %v897
        %v952 = vunpack.c.l.b16 %v898
        %v953 = vunpack.c.l.b16 %v899
        %v954 = vunpack.c.l.b16 %v900
        %v955 = vpack.c.b16 %v952, %v951
        %v956 = vpack.c.b16 %v954, %v953
        %vm959 = vcmask 261120
        %v961 = vsel %vm959, %v922, 0
        %963 = vmatprep.subr.bf16.mxu0 0
        %964 = vmatpush1.bf16.msra.mxu0 %v955
        %965 = vmatprep.subr.bf16.mxu0 0
        %966 = vmatpush1.bf16.msra.mxu0 %v956
        %967 = vmatprep.subr.bf16.mxu0 0
        %968 = vmatpush1.bf16.msra.mxu0 0
        %969 = vmatprep.subr.bf16.mxu0 0
        %970 = vmatpush1.bf16.msra.mxu0 0
        %971 = vmatprep.subr.bf16.mxu0 0
        %972 = vmatpush1.bf16.msra.mxu0 0
        %973 = vmatprep.subr.bf16.mxu0 0
        %974 = vmatpush1.bf16.msra.mxu0 0
        %975 = vmatprep.subr.bf16.mxu0 0
        %976 = vmatpush1.bf16.msra.mxu0 0
        %977 = vmatprep.subr.bf16.mxu0 0
        %978 = vmatpush1.bf16.msra.mxu0 0
        %979 = vmatprep.subr.bf16.mxu0 0
        %980 = vmatpush1.bf16.msra.mxu0 0
        %981 = vmatprep.subr.bf16.mxu0 0
        %982 = vmatpush1.bf16.msra.mxu0 0
        %983 = vmatprep.subr.bf16.mxu0 0
        %984 = vmatpush1.bf16.msra.mxu0 0
        %985 = vmatprep.subr.bf16.mxu0 0
        %986 = vmatpush1.bf16.msra.mxu0 0
        %987 = vmatprep.subr.bf16.mxu0 0
        %988 = vmatpush1.bf16.msra.mxu0 0
        %989 = vmatprep.subr.bf16.mxu0 0
        %990 = vmatpush1.bf16.msra.mxu0 0
        %991 = vmatprep.subr.bf16.mxu0 0
        %992 = vmatpush1.bf16.msra.mxu0 0
        %993 = vmatprep.subr.bf16.mxu0 0
        %994 = vmatpush1.bf16.msra.mxu0 0
        %995 = vmatprep.mubr.bf16.mxu0 0
        %996 = vmatmul.mubr.bf16.gmra.mrb[0].mxu0 %v961
        %v997 = vpop.f32.mrb[0].mxu0
        %v998 = vadd.f32 %v930, %v997
        %v999 = vpop.f32.mrb[0].mxu0
        %v1000 = vpop.f32.mrb[0].mxu0
        %v1001 = vpop.f32.mrb[0].mxu0
        %1002 = vdwg.mxu0
        %v1007 = vunpack.c.l.b16 %v901
        %v1008 = vunpack.c.l.b16 %v902
        %v1009 = vunpack.c.l.b16 %v903
        %v1010 = vunpack.c.l.b16 %v904
        %v1011 = vpack.c.b16 %v1008, %v1007
        %v1012 = vpack.c.b16 %v1010, %v1009
        %1015 = vmatprep.subr.bf16.mxu0 0
        %1016 = vmatpush1.bf16.msra.mxu0 %v1011
        %1017 = vmatprep.subr.bf16.mxu0 0
        %1018 = vmatpush1.bf16.msra.mxu0 %v1012
        %1019 = vmatprep.subr.bf16.mxu0 0
        %1020 = vmatpush1.bf16.msra.mxu0 0
        %1021 = vmatprep.subr.bf16.mxu0 0
        %1022 = vmatpush1.bf16.msra.mxu0 0
        %1023 = vmatprep.subr.bf16.mxu0 0
        %1024 = vmatpush1.bf16.msra.mxu0 0
        %1025 = vmatprep.subr.bf16.mxu0 0
        %1026 = vmatpush1.bf16.msra.mxu0 0
        %1027 = vmatprep.subr.bf16.mxu0 0
        %1028 = vmatpush1.bf16.msra.mxu0 0
        %1029 = vmatprep.subr.bf16.mxu0 0
        %1030 = vmatpush1.bf16.msra.mxu0 0
        %1031 = vmatprep.subr.bf16.mxu0 0
        %1032 = vmatpush1.bf16.msra.mxu0 0
        %1033 = vmatprep.subr.bf16.mxu0 0
        %1034 = vmatpush1.bf16.msra.mxu0 0
        %1035 = vmatprep.subr.bf16.mxu0 0
        %1036 = vmatpush1.bf16.msra.mxu0 0
        %1037 = vmatprep.subr.bf16.mxu0 0
        %1038 = vmatpush1.bf16.msra.mxu0 0
        %1039 = vmatprep.subr.bf16.mxu0 0
        %1040 = vmatpush1.bf16.msra.mxu0 0
        %1041 = vmatprep.subr.bf16.mxu0 0
        %1042 = vmatpush1.bf16.msra.mxu0 0
        %1043 = vmatprep.subr.bf16.mxu0 0
        %1044 = vmatpush1.bf16.msra.mxu0 0
        %1045 = vmatprep.subr.bf16.mxu0 0
        %1046 = vmatpush1.bf16.msra.mxu0 0
        %1047 = vmatprep.mubr.bf16.mxu0 0
        %1048 = vmatmul.mubr.bf16.gmra.mrb[0].mxu0 %v961
        %v1049 = vpop.f32.mrb[0].mxu0
        %v1050 = vadd.f32 %v934, %v1049
        %v1051 = vpop.f32.mrb[0].mxu0
        %v1052 = vpop.f32.mrb[0].mxu0
        %v1053 = vpop.f32.mrb[0].mxu0
        %1054 = vdwg.mxu0
        %v1059 = vunpack.c.l.b16 %v905
        %v1060 = vunpack.c.l.b16 %v906
        %v1061 = vunpack.c.l.b16 %v907
        %v1062 = vunpack.c.l.b16 %v908
        %v1063 = vpack.c.b16 %v1060, %v1059
        %v1064 = vpack.c.b16 %v1062, %v1061
        %1067 = vmatprep.subr.bf16.mxu0 0
        %1068 = vmatpush1.bf16.msra.mxu0 %v1063
        %1069 = vmatprep.subr.bf16.mxu0 0
        %1070 = vmatpush1.bf16.msra.mxu0 %v1064
        %1071 = vmatprep.subr.bf16.mxu0 0
        %1072 = vmatpush1.bf16.msra.mxu0 0
        %1073 = vmatprep.subr.bf16.mxu0 0
        %1074 = vmatpush1.bf16.msra.mxu0 0
        %1075 = vmatprep.subr.bf16.mxu0 0
        %1076 = vmatpush1.bf16.msra.mxu0 0
        %1077 = vmatprep.subr.bf16.mxu0 0
        %1078 = vmatpush1.bf16.msra.mxu0 0
        %1079 = vmatprep.subr.bf16.mxu0 0
        %1080 = vmatpush1.bf16.msra.mxu0 0
        %1081 = vmatprep.subr.bf16.mxu0 0
        %1082 = vmatpush1.bf16.msra.mxu0 0
        %1083 = vmatprep.subr.bf16.mxu0 0
        %1084 = vmatpush1.bf16.msra.mxu0 0
        %1085 = vmatprep.subr.bf16.mxu0 0
        %1086 = vmatpush1.bf16.msra.mxu0 0
        %1087 = vmatprep.subr.bf16.mxu0 0
        %1088 = vmatpush1.bf16.msra.mxu0 0
        %1089 = vmatprep.subr.bf16.mxu0 0
        %1090 = vmatpush1.bf16.msra.mxu0 0
        %1091 = vmatprep.subr.bf16.mxu0 0
        %1092 = vmatpush1.bf16.msra.mxu0 0
        %1093 = vmatprep.subr.bf16.mxu0 0
        %1094 = vmatpush1.bf16.msra.mxu0 0
        %1095 = vmatprep.subr.bf16.mxu0 0
        %1096 = vmatpush1.bf16.msra.mxu0 0
        %1097 = vmatprep.subr.bf16.mxu0 0
        %1098 = vmatpush1.bf16.msra.mxu0 0
        %1099 = vmatprep.mubr.bf16.mxu0 0
        %1100 = vmatmul.mubr.bf16.gmra.mrb[0].mxu0 %v961
        %v1101 = vpop.f32.mrb[0].mxu0
        %v1102 = vadd.f32 %v938, %v1101
        %v1103 = vpop.f32.mrb[0].mxu0
        %v1104 = vpop.f32.mrb[0].mxu0
        %v1105 = vpop.f32.mrb[0].mxu0
        %1106 = vdwg.mxu0
        %v1111 = vunpack.c.l.b16 %v909
        %v1112 = vunpack.c.l.b16 %v910
        %v1113 = vunpack.c.l.b16 %v911
        %v1114 = vunpack.c.l.b16 %v912
        %v1115 = vpack.c.b16 %v1112, %v1111
        %v1116 = vpack.c.b16 %v1114, %v1113
        %1119 = vmatprep.subr.bf16.mxu0 0
        %1120 = vmatpush1.bf16.msra.mxu0 %v1115
        %1121 = vmatprep.subr.bf16.mxu0 0
        %1122 = vmatpush1.bf16.msra.mxu0 %v1116
        %1123 = vmatprep.subr.bf16.mxu0 0
        %1124 = vmatpush1.bf16.msra.mxu0 0
        %1125 = vmatprep.subr.bf16.mxu0 0
        %1126 = vmatpush1.bf16.msra.mxu0 0
        %1127 = vmatprep.subr.bf16.mxu0 0
        %1128 = vmatpush1.bf16.msra.mxu0 0
        %1129 = vmatprep.subr.bf16.mxu0 0
        %1130 = vmatpush1.bf16.msra.mxu0 0
        %1131 = vmatprep.subr.bf16.mxu0 0
        %1132 = vmatpush1.bf16.msra.mxu0 0
        %1133 = vmatprep.subr.bf16.mxu0 0
        %1134 = vmatpush1.bf16.msra.mxu0 0
        %1135 = vmatprep.subr.bf16.mxu0 0
        %1136 = vmatpush1.bf16.msra.mxu0 0
        %1137 = vmatprep.subr.bf16.mxu0 0
        %1138 = vmatpush1.bf16.msra.mxu0 0
        %1139 = vmatprep.subr.bf16.mxu0 0
        %1140 = vmatpush1.bf16.msra.mxu0 0
        %1141 = vmatprep.subr.bf16.mxu0 0
        %1142 = vmatpush1.bf16.msra.mxu0 0
        %1143 = vmatprep.subr.bf16.mxu0 0
        %1144 = vmatpush1.bf16.msra.mxu0 0
        %1145 = vmatprep.subr.bf16.mxu0 0
        %1146 = vmatpush1.bf16.msra.mxu0 0
        %1147 = vmatprep.subr.bf16.mxu0 0
        %1148 = vmatpush1.bf16.msra.mxu0 0
        %1149 = vmatprep.subr.bf16.mxu0 0
        %1150 = vmatpush1.bf16.msra.mxu0 0
        %1151 = vmatprep.mubr.bf16.mxu0 0
        %1152 = vmatmul.mubr.bf16.gmra.mrb[0].mxu0 %v961
        %v1153 = vpop.f32.mrb[0].mxu0
        %v1154 = vadd.f32 %v942, %v1153
        %v1155 = vpop.f32.mrb[0].mxu0
        %v1156 = vpop.f32.mrb[0].mxu0
        %v1157 = vpop.f32.mrb[0].mxu0
        %1158 = vdwg.mxu0
        %v1159 = vmul.f32 %v998, 0.35355338
        %v1160 = vmul.f32 %v1050, 0.35355338
        %v1161 = vmul.f32 %v1102, 0.35355338
        %v1162 = vmul.f32 %v1154, 0.35355338
        %v1163 = vpack.c.bf16 %v1159, %v1159
        %v1164 = vpack.c.bf16 %v1160, %v1160
        %v1165 = vpack.c.bf16 %v1161, %v1161
        %v1166 = vpack.c.bf16 %v1162, %v1162
        %v1167 = vpack.c.bf16 %v998, %v998
        %v1168 = vpack.c.bf16 %v1050, %v1050
        %v1169 = vpack.c.bf16 %v1102, %v1102
        %v1170 = vpack.c.bf16 %v1154, %v1154
        %1172 = vrot.lane.b32.xlu0 %v1167, 120
        %v1173 = vpop.permute.xlu0 %1172
        %vm1174 = vcmask 64512
        %v1176 = vsel %vm1174, %v1163, 0
        %v1179 = vsel %vm1174, %v1173, 0
        %1181 = vmatprep.subr.bf16.mxu0 0
        %1182 = vmatpush1.bf16.xpose.msra.mxu0 %v1179
        %1183 = vmatprep.subr.bf16.mxu0 0
        %1184 = vmatpush1.bf16.xpose.msra.mxu0 0
        %1185 = vmatprep.subr.bf16.mxu0 0
        %1186 = vmatpush1.bf16.xpose.msra.mxu0 0
        %1187 = vmatprep.subr.bf16.mxu0 0
        %1188 = vmatpush1.bf16.xpose.msra.mxu0 0
        %1189 = vmatprep.subr.bf16.mxu0 0
        %1190 = vmatpush1.bf16.xpose.msra.mxu0 0
        %1191 = vmatprep.subr.bf16.mxu0 0
        %1192 = vmatpush1.bf16.xpose.msra.mxu0 0
        %1193 = vmatprep.subr.bf16.mxu0 0
        %1194 = vmatpush1.bf16.xpose.msra.mxu0 0
        %1195 = vmatprep.subr.bf16.mxu0 0
        %1196 = vmatpush1.bf16.xpose.msra.mxu0 0
        %1197 = vmatprep.subr.bf16.mxu0 0
        %1198 = vmatpush1.bf16.xpose.msra.mxu0 0
        %1199 = vmatprep.subr.bf16.mxu0 0
        %1200 = vmatpush1.bf16.xpose.msra.mxu0 0
        %1201 = vmatprep.subr.bf16.mxu0 0
        %1202 = vmatpush1.bf16.xpose.msra.mxu0 0
        %1203 = vmatprep.subr.bf16.mxu0 0
        %1204 = vmatpush1.bf16.xpose.msra.mxu0 0
        %1205 = vmatprep.subr.bf16.mxu0 0
        %1206 = vmatpush1.bf16.xpose.msra.mxu0 0
        %1207 = vmatprep.subr.bf16.mxu0 0
        %1208 = vmatpush1.bf16.xpose.msra.mxu0 0
        %1209 = vmatprep.subr.bf16.mxu0 0
        %1210 = vmatpush1.bf16.xpose.msra.mxu0 0
        %1211 = vmatprep.subr.bf16.mxu0 0
        %1212 = vmatpush1.bf16.xpose.msra.mxu0 0
        %1213 = vmatprep.mubr.bf16.mxu0 0
        %1214 = vmatmul.mubr.bf16.gmra.mrb[0].mxu0 %v1176
        %v1215 = vpop.f32.mrb[0].mxu0
        %v1216 = vadd.f32 0.0, %v1215
        %v1217 = vpop.f32.mrb[0].mxu0
        %v1218 = vpop.f32.mrb[0].mxu0
        %v1219 = vpop.f32.mrb[0].mxu0
        %1220 = vdwg.mxu0
        %1222 = vrot.lane.b32.xlu0 %v1168, 120
        %v1223 = vpop.permute.xlu0 %1222
        %v1225 = vsel %vm1174, %v1164, 0
        %v1228 = vsel %vm1174, %v1223, 0
        %1230 = vmatprep.subr.bf16.mxu0 0
        %1231 = vmatpush1.bf16.xpose.msra.mxu0 %v1228
        %1232 = vmatprep.subr.bf16.mxu0 0
        %1233 = vmatpush1.bf16.xpose.msra.mxu0 0
        %1234 = vmatprep.subr.bf16.mxu0 0
        %1235 = vmatpush1.bf16.xpose.msra.mxu0 0
        %1236 = vmatprep.subr.bf16.mxu0 0
        %1237 = vmatpush1.bf16.xpose.msra.mxu0 0
        %1238 = vmatprep.subr.bf16.mxu0 0
        %1239 = vmatpush1.bf16.xpose.msra.mxu0 0
        %1240 = vmatprep.subr.bf16.mxu0 0
        %1241 = vmatpush1.bf16.xpose.msra.mxu0 0
        %1242 = vmatprep.subr.bf16.mxu0 0
        %1243 = vmatpush1.bf16.xpose.msra.mxu0 0
        %1244 = vmatprep.subr.bf16.mxu0 0
        %1245 = vmatpush1.bf16.xpose.msra.mxu0 0
        %1246 = vmatprep.subr.bf16.mxu0 0
        %1247 = vmatpush1.bf16.xpose.msra.mxu0 0
        %1248 = vmatprep.subr.bf16.mxu0 0
        %1249 = vmatpush1.bf16.xpose.msra.mxu0 0
        %1250 = vmatprep.subr.bf16.mxu0 0
        %1251 = vmatpush1.bf16.xpose.msra.mxu0 0
        %1252 = vmatprep.subr.bf16.mxu0 0
        %1253 = vmatpush1.bf16.xpose.msra.mxu0 0
        %1254 = vmatprep.subr.bf16.mxu0 0
        %1255 = vmatpush1.bf16.xpose.msra.mxu0 0
        %1256 = vmatprep.subr.bf16.mxu0 0
        %1257 = vmatpush1.bf16.xpose.msra.mxu0 0
        %1258 = vmatprep.subr.bf16.mxu0 0
        %1259 = vmatpush1.bf16.xpose.msra.mxu0 0
        %1260 = vmatprep.subr.bf16.mxu0 0
        %1261 = vmatpush1.bf16.xpose.msra.mxu0 0
        %1262 = vmatprep.mubr.bf16.mxu0 0
        %1263 = vmatmul.mubr.bf16.gmra.mrb[0].mxu0 %v1225
        %v1264 = vpop.f32.mrb[0].mxu0
        %v1265 = vadd.f32 0.0, %v1264
        %v1266 = vpop.f32.mrb[0].mxu0
        %v1267 = vpop.f32.mrb[0].mxu0
        %v1268 = vpop.f32.mrb[0].mxu0
        %1269 = vdwg.mxu0
        %1271 = vrot.lane.b32.xlu0 %v1169, 120
        %v1272 = vpop.permute.xlu0 %1271
        %v1274 = vsel %vm1174, %v1165, 0
        %v1277 = vsel %vm1174, %v1272, 0
        %1279 = vmatprep.subr.bf16.mxu0 0
        %1280 = vmatpush1.bf16.xpose.msra.mxu0 %v1277
        %1281 = vmatprep.subr.bf16.mxu0 0
        %1282 = vmatpush1.bf16.xpose.msra.mxu0 0
        %1283 = vmatprep.subr.bf16.mxu0 0
        %1284 = vmatpush1.bf16.xpose.msra.mxu0 0
        %1285 = vmatprep.subr.bf16.mxu0 0
        %1286 = vmatpush1.bf16.xpose.msra.mxu0 0
        %1287 = vmatprep.subr.bf16.mxu0 0
        %1288 = vmatpush1.bf16.xpose.msra.mxu0 0
        %1289 = vmatprep.subr.bf16.mxu0 0
        %1290 = vmatpush1.bf16.xpose.msra.mxu0 0
        %1291 = vmatprep.subr.bf16.mxu0 0
        %1292 = vmatpush1.bf16.xpose.msra.mxu0 0
        %1293 = vmatprep.subr.bf16.mxu0 0
        %1294 = vmatpush1.bf16.xpose.msra.mxu0 0
        %1295 = vmatprep.subr.bf16.mxu0 0
        %1296 = vmatpush1.bf16.xpose.msra.mxu0 0
        %1297 = vmatprep.subr.bf16.mxu0 0
        %1298 = vmatpush1.bf16.xpose.msra.mxu0 0
        %1299 = vmatprep.subr.bf16.mxu0 0
        %1300 = vmatpush1.bf16.xpose.msra.mxu0 0
        %1301 = vmatprep.subr.bf16.mxu0 0
        %1302 = vmatpush1.bf16.xpose.msra.mxu0 0
        %1303 = vmatprep.subr.bf16.mxu0 0
        %1304 = vmatpush1.bf16.xpose.msra.mxu0 0
        %1305 = vmatprep.subr.bf16.mxu0 0
        %1306 = vmatpush1.bf16.xpose.msra.mxu0 0
        %1307 = vmatprep.subr.bf16.mxu0 0
        %1308 = vmatpush1.bf16.xpose.msra.mxu0 0
        %1309 = vmatprep.subr.bf16.mxu0 0
        %1310 = vmatpush1.bf16.xpose.msra.mxu0 0
        %1311 = vmatprep.mubr.bf16.mxu0 0
        %1312 = vmatmul.mubr.bf16.gmra.mrb[0].mxu0 %v1274
        %v1313 = vpop.f32.mrb[0].mxu0
        %v1314 = vadd.f32 0.0, %v1313
        %v1315 = vpop.f32.mrb[0].mxu0
        %v1316 = vpop.f32.mrb[0].mxu0
        %v1317 = vpop.f32.mrb[0].mxu0
        %1318 = vdwg.mxu0
        %1320 = vrot.lane.b32.xlu0 %v1170, 120
        %v1321 = vpop.permute.xlu0 %1320
        %v1323 = vsel %vm1174, %v1166, 0
        %v1326 = vsel %vm1174, %v1321, 0
        %1328 = vmatprep.subr.bf16.mxu0 0
        %1329 = vmatpush1.bf16.xpose.msra.mxu0 %v1326
        %1330 = vmatprep.subr.bf16.mxu0 0
        %1331 = vmatpush1.bf16.xpose.msra.mxu0 0
        %1332 = vmatprep.subr.bf16.mxu0 0
        %1333 = vmatpush1.bf16.xpose.msra.mxu0 0
        %1334 = vmatprep.subr.bf16.mxu0 0
        %1335 = vmatpush1.bf16.xpose.msra.mxu0 0
        %1336 = vmatprep.subr.bf16.mxu0 0
        %1337 = vmatpush1.bf16.xpose.msra.mxu0 0
        %1338 = vmatprep.subr.bf16.mxu0 0
        %1339 = vmatpush1.bf16.xpose.msra.mxu0 0
        %1340 = vmatprep.subr.bf16.mxu0 0
        %1341 = vmatpush1.bf16.xpose.msra.mxu0 0
        %1342 = vmatprep.subr.bf16.mxu0 0
        %1343 = vmatpush1.bf16.xpose.msra.mxu0 0
        %1344 = vmatprep.subr.bf16.mxu0 0
        %1345 = vmatpush1.bf16.xpose.msra.mxu0 0
        %1346 = vmatprep.subr.bf16.mxu0 0
        %1347 = vmatpush1.bf16.xpose.msra.mxu0 0
        %1348 = vmatprep.subr.bf16.mxu0 0
        %1349 = vmatpush1.bf16.xpose.msra.mxu0 0
        %1350 = vmatprep.subr.bf16.mxu0 0
        %1351 = vmatpush1.bf16.xpose.msra.mxu0 0
        %1352 = vmatprep.subr.bf16.mxu0 0
        %1353 = vmatpush1.bf16.xpose.msra.mxu0 0
        %1354 = vmatprep.subr.bf16.mxu0 0
        %1355 = vmatpush1.bf16.xpose.msra.mxu0 0
        %1356 = vmatprep.subr.bf16.mxu0 0
        %1357 = vmatpush1.bf16.xpose.msra.mxu0 0
        %1358 = vmatprep.subr.bf16.mxu0 0
        %1359 = vmatpush1.bf16.xpose.msra.mxu0 0
        %1360 = vmatprep.mubr.bf16.mxu0 0
        %1361 = vmatmul.mubr.bf16.gmra.mrb[0].mxu0 %v1323
        %v1362 = vpop.f32.mrb[0].mxu0
        %v1363 = vadd.f32 0.0, %v1362
        %v1364 = vpop.f32.mrb[0].mxu0
        %v1365 = vpop.f32.mrb[0].mxu0
        %v1366 = vpop.f32.mrb[0].mxu0
        %1367 = vdwg.mxu0
        %v1368 = vlaneseq
        %v1369 = vshrl.u32 %v1368, 7
        %v1370 = vlaneseq
        %v1371 = vand.u32 %v1370, 127
        %vm1372 = vcmp.le.s32.totalorder %v1371, %v1369
        %v1373 = vsel %vm1372, 1, 0
        %vm1374 = vcmp.eq.s32.totalorder %v1373, 1
        %v1375 = vsel %vm1374, %v1216, -1e+09
        %v1376 = vsel %vm1374, %v1265, -1e+09
        %v1377 = vsel %vm1374, %v1314, -1e+09
        %v1378 = vsel %vm1374, %v1363, -1e+09
        %v1379 = vsel %vm1174, %v1375, -inf
        %1380 = vmax.xlane.f32.xlu0 %v1379
        %v1381 = vpop.xlane.xlu0 %1380
        %v1382 = vsel %vm1174, %v1376, -inf
        %1383 = vmax.xlane.f32.xlu0 %v1382
        %v1384 = vpop.xlane.xlu0 %1383
        %v1385 = vsel %vm1174, %v1377, -inf
        %1386 = vmax.xlane.f32.xlu0 %v1385
        %v1387 = vpop.xlane.xlu0 %1386
        %v1388 = vsel %vm1174, %v1378, -inf
        %1389 = vmax.xlane.f32.xlu0 %v1388
        %v1390 = vpop.xlane.xlu0 %1389
        %v1391 = vsub.f32 %v1375, %v1381
        %v1392 = vsub.f32 %v1376, %v1384
        %v1393 = vsub.f32 %v1377, %v1387
        %v1394 = vsub.f32 %v1378, %v1390
        %v1395 = vmul.f32 %v1391, 1.442695
        %v1396 = vpow.pop %v1395
        %v1397 = vmul.f32 %v1392, 1.442695
        %v1398 = vpow.pop %v1397
        %v1399 = vmul.f32 %v1393, 1.442695
        %v1400 = vpow.pop %v1399
        %v1401 = vmul.f32 %v1394, 1.442695
        %v1402 = vpow.pop %v1401
        %v1403 = vsel %vm1174, %v1396, 0.0
        %1404 = vadd.xlane.f32.xlu0 %v1403
        %v1405 = vpop.xlane.xlu0 %1404
        %v1406 = vsel %vm1174, %v1398, 0.0
        %1407 = vadd.xlane.f32.xlu0 %v1406
        %v1408 = vpop.xlane.xlu0 %1407
        %v1409 = vsel %vm1174, %v1400, 0.0
        %1410 = vadd.xlane.f32.xlu0 %v1409
        %v1411 = vpop.xlane.xlu0 %1410
        %v1412 = vsel %vm1174, %v1402, 0.0
        %1413 = vadd.xlane.f32.xlu0 %v1412
        %v1414 = vpop.xlane.xlu0 %1413
        %v1415 = vrcp.pop %v1405
        %v1416 = vrcp.pop %v1408
        %v1417 = vrcp.pop %v1411
        %v1418 = vrcp.pop %v1414
        %v1419 = vmul.f32 %v1396, %v1415
        %v1420 = vmul.f32 %v1398, %v1416
        %v1421 = vmul.f32 %v1400, %v1417
        %v1422 = vmul.f32 %v1402, %v1418
        %v1423 = vpack.c.bf16 %v1419, %v1419
        %v1424 = vpack.c.bf16 %v1420, %v1420
        %v1425 = vpack.c.bf16 %v1421, %v1421
        %v1426 = vpack.c.bf16 %v1422, %v1422
        %1427 = vrot.lane.b32.xlu0 %v1167, 112
        %v1428 = vpop.permute.xlu0 %1427
        %v1430 = vsel %vm1174, %v1423, 0
        %vm1432 = vcmask 1043456
        %v1434 = vsel %vm1432, %v1428, 0
        %1436 = vmatprep.subr.bf16.mxu0 0
        %1437 = vmatpush1.bf16.msra.mxu0 %v1434
        %1438 = vmatprep.subr.bf16.mxu0 0
        %1439 = vmatpush1.bf16.msra.mxu0 0
        %1440 = vmatprep.subr.bf16.mxu0 0
        %1441 = vmatpush1.bf16.msra.mxu0 0
        %1442 = vmatprep.subr.bf16.mxu0 0
        %1443 = vmatpush1.bf16.msra.mxu0 0
        %1444 = vmatprep.subr.bf16.mxu0 0
        %1445 = vmatpush1.bf16.msra.mxu0 0
        %1446 = vmatprep.subr.bf16.mxu0 0
        %1447 = vmatpush1.bf16.msra.mxu0 0
        %1448 = vmatprep.subr.bf16.mxu0 0
        %1449 = vmatpush1.bf16.msra.mxu0 0
        %1450 = vmatprep.subr.bf16.mxu0 0
        %1451 = vmatpush1.bf16.msra.mxu0 0
        %1452 = vmatprep.subr.bf16.mxu0 0
        %1453 = vmatpush1.bf16.msra.mxu0 0
        %1454 = vmatprep.subr.bf16.mxu0 0
        %1455 = vmatpush1.bf16.msra.mxu0 0
        %1456 = vmatprep.subr.bf16.mxu0 0
        %1457 = vmatpush1.bf16.msra.mxu0 0
        %1458 = vmatprep.subr.bf16.mxu0 0
        %1459 = vmatpush1.bf16.msra.mxu0 0
        %1460 = vmatprep.subr.bf16.mxu0 0
        %1461 = vmatpush1.bf16.msra.mxu0 0
        %1462 = vmatprep.subr.bf16.mxu0 0
        %1463 = vmatpush1.bf16.msra.mxu0 0
        %1464 = vmatprep.subr.bf16.mxu0 0
        %1465 = vmatpush1.bf16.msra.mxu0 0
        %1466 = vmatprep.subr.bf16.mxu0 0
        %1467 = vmatpush1.bf16.msra.mxu0 0
        %1468 = vmatprep.mubr.bf16.mxu0 0
        %1469 = vmatmul.mubr.bf16.gmra.mrb[0].mxu0 %v1430
        %v1470 = vpop.f32.mrb[0].mxu0
        %v1471 = vadd.f32 0.0, %v1470
        %v1472 = vpop.f32.mrb[0].mxu0
        %v1473 = vpop.f32.mrb[0].mxu0
        %v1474 = vpop.f32.mrb[0].mxu0
        %1475 = vdwg.mxu0
        %1476 = vrot.lane.b32.xlu0 %v1168, 112
        %v1477 = vpop.permute.xlu0 %1476
        %v1479 = vsel %vm1174, %v1424, 0
        %v1482 = vsel %vm1432, %v1477, 0
        %1484 = vmatprep.subr.bf16.mxu0 0
        %1485 = vmatpush1.bf16.msra.mxu0 %v1482
        %1486 = vmatprep.subr.bf16.mxu0 0
        %1487 = vmatpush1.bf16.msra.mxu0 0
        %1488 = vmatprep.subr.bf16.mxu0 0
        %1489 = vmatpush1.bf16.msra.mxu0 0
        %1490 = vmatprep.subr.bf16.mxu0 0
        %1491 = vmatpush1.bf16.msra.mxu0 0
        %1492 = vmatprep.subr.bf16.mxu0 0
        %1493 = vmatpush1.bf16.msra.mxu0 0
        %1494 = vmatprep.subr.bf16.mxu0 0
        %1495 = vmatpush1.bf16.msra.mxu0 0
        %1496 = vmatprep.subr.bf16.mxu0 0
        %1497 = vmatpush1.bf16.msra.mxu0 0
        %1498 = vmatprep.subr.bf16.mxu0 0
        %1499 = vmatpush1.bf16.msra.mxu0 0
        %1500 = vmatprep.subr.bf16.mxu0 0
        %1501 = vmatpush1.bf16.msra.mxu0 0
        %1502 = vmatprep.subr.bf16.mxu0 0
        %1503 = vmatpush1.bf16.msra.mxu0 0
        %1504 = vmatprep.subr.bf16.mxu0 0
        %1505 = vmatpush1.bf16.msra.mxu0 0
        %1506 = vmatprep.subr.bf16.mxu0 0
        %1507 = vmatpush1.bf16.msra.mxu0 0
        %1508 = vmatprep.subr.bf16.mxu0 0
        %1509 = vmatpush1.bf16.msra.mxu0 0
        %1510 = vmatprep.subr.bf16.mxu0 0
        %1511 = vmatpush1.bf16.msra.mxu0 0
        %1512 = vmatprep.subr.bf16.mxu0 0
        %1513 = vmatpush1.bf16.msra.mxu0 0
        %1514 = vmatprep.subr.bf16.mxu0 0
        %1515 = vmatpush1.bf16.msra.mxu0 0
        %1516 = vmatprep.mubr.bf16.mxu0 0
        %1517 = vmatmul.mubr.bf16.gmra.mrb[0].mxu0 %v1479
        %v1518 = vpop.f32.mrb[0].mxu0
        %v1519 = vadd.f32 0.0, %v1518
        %v1520 = vpop.f32.mrb[0].mxu0
        %v1521 = vpop.f32.mrb[0].mxu0
        %v1522 = vpop.f32.mrb[0].mxu0
        %1523 = vdwg.mxu0
        %1524 = vrot.lane.b32.xlu0 %v1169, 112
        %v1525 = vpop.permute.xlu0 %1524
        %v1527 = vsel %vm1174, %v1425, 0
        %v1530 = vsel %vm1432, %v1525, 0
        %1532 = vmatprep.subr.bf16.mxu0 0
        %1533 = vmatpush1.bf16.msra.mxu0 %v1530
        %1534 = vmatprep.subr.bf16.mxu0 0
        %1535 = vmatpush1.bf16.msra.mxu0 0
        %1536 = vmatprep.subr.bf16.mxu0 0
        %1537 = vmatpush1.bf16.msra.mxu0 0
        %1538 = vmatprep.subr.bf16.mxu0 0
        %1539 = vmatpush1.bf16.msra.mxu0 0
        %1540 = vmatprep.subr.bf16.mxu0 0
        %1541 = vmatpush1.bf16.msra.mxu0 0
        %1542 = vmatprep.subr.bf16.mxu0 0
        %1543 = vmatpush1.bf16.msra.mxu0 0
        %1544 = vmatprep.subr.bf16.mxu0 0
        %1545 = vmatpush1.bf16.msra.mxu0 0
        %1546 = vmatprep.subr.bf16.mxu0 0
        %1547 = vmatpush1.bf16.msra.mxu0 0
        %1548 = vmatprep.subr.bf16.mxu0 0
        %1549 = vmatpush1.bf16.msra.mxu0 0
        %1550 = vmatprep.subr.bf16.mxu0 0
        %1551 = vmatpush1.bf16.msra.mxu0 0
        %1552 = vmatprep.subr.bf16.mxu0 0
        %1553 = vmatpush1.bf16.msra.mxu0 0
        %1554 = vmatprep.subr.bf16.mxu0 0
        %1555 = vmatpush1.bf16.msra.mxu0 0
        %1556 = vmatprep.subr.bf16.mxu0 0
        %1557 = vmatpush1.bf16.msra.mxu0 0
        %1558 = vmatprep.subr.bf16.mxu0 0
        %1559 = vmatpush1.bf16.msra.mxu0 0
        %1560 = vmatprep.subr.bf16.mxu0 0
        %1561 = vmatpush1.bf16.msra.mxu0 0
        %1562 = vmatprep.subr.bf16.mxu0 0
        %1563 = vmatpush1.bf16.msra.mxu0 0
        %1564 = vmatprep.mubr.bf16.mxu0 0
        %1565 = vmatmul.mubr.bf16.gmra.mrb[0].mxu0 %v1527
        %v1566 = vpop.f32.mrb[0].mxu0
        %v1567 = vadd.f32 0.0, %v1566
        %v1568 = vpop.f32.mrb[0].mxu0
        %v1569 = vpop.f32.mrb[0].mxu0
        %v1570 = vpop.f32.mrb[0].mxu0
        %1571 = vdwg.mxu0
        %1572 = vrot.lane.b32.xlu0 %v1170, 112
        %v1573 = vpop.permute.xlu0 %1572
        %v1575 = vsel %vm1174, %v1426, 0
        %v1578 = vsel %vm1432, %v1573, 0
        %1580 = vmatprep.subr.bf16.mxu0 0
        %1581 = vmatpush1.bf16.msra.mxu0 %v1578
        %1582 = vmatprep.subr.bf16.mxu0 0
        %1583 = vmatpush1.bf16.msra.mxu0 0
        %1584 = vmatprep.subr.bf16.mxu0 0
        %1585 = vmatpush1.bf16.msra.mxu0 0
        %1586 = vmatprep.subr.bf16.mxu0 0
        %1587 = vmatpush1.bf16.msra.mxu0 0
        %1588 = vmatprep.subr.bf16.mxu0 0
        %1589 = vmatpush1.bf16.msra.mxu0 0
        %1590 = vmatprep.subr.bf16.mxu0 0
        %1591 = vmatpush1.bf16.msra.mxu0 0
        %1592 = vmatprep.subr.bf16.mxu0 0
        %1593 = vmatpush1.bf16.msra.mxu0 0
        %1594 = vmatprep.subr.bf16.mxu0 0
        %1595 = vmatpush1.bf16.msra.mxu0 0
        %1596 = vmatprep.subr.bf16.mxu0 0
        %1597 = vmatpush1.bf16.msra.mxu0 0
        %1598 = vmatprep.subr.bf16.mxu0 0
        %1599 = vmatpush1.bf16.msra.mxu0 0
        %1600 = vmatprep.subr.bf16.mxu0 0
        %1601 = vmatpush1.bf16.msra.mxu0 0
        %1602 = vmatprep.subr.bf16.mxu0 0
        %1603 = vmatpush1.bf16.msra.mxu0 0
        %1604 = vmatprep.subr.bf16.mxu0 0
        %1605 = vmatpush1.bf16.msra.mxu0 0
        %1606 = vmatprep.subr.bf16.mxu0 0
        %1607 = vmatpush1.bf16.msra.mxu0 0
        %1608 = vmatprep.subr.bf16.mxu0 0
        %1609 = vmatpush1.bf16.msra.mxu0 0
        %1610 = vmatprep.subr.bf16.mxu0 0
        %1611 = vmatpush1.bf16.msra.mxu0 0
        %1612 = vmatprep.mubr.bf16.mxu0 0
        %1613 = vmatmul.mubr.bf16.gmra.mrb[0].mxu0 %v1575
        %v1614 = vpop.f32.mrb[0].mxu0
        %v1615 = vadd.f32 0.0, %v1614
        %v1616 = vpop.f32.mrb[0].mxu0
        %v1617 = vpop.f32.mrb[0].mxu0
        %v1618 = vpop.f32.mrb[0].mxu0
        %1619 = vdwg.mxu0
        %v1620 = vpack.c.bf16 %v1471, %v1471
        %v1621 = vpack.c.bf16 %v1519, %v1519
        %v1622 = vpack.c.bf16 %v1567, %v1567
        %v1623 = vpack.c.bf16 %v1615, %v1615
        %v1625 = vsel %vm1174, %v1620, 0
        %v1628 = vsel %vm1432, %v917, 0
        %1630 = vmatprep.subr.bf16.mxu0 0
        %1631 = vmatpush1.bf16.msra.mxu0 %v1628
        %1632 = vmatprep.subr.bf16.mxu0 0
        %1633 = vmatpush1.bf16.msra.mxu0 0
        %1634 = vmatprep.subr.bf16.mxu0 0
        %1635 = vmatpush1.bf16.msra.mxu0 0
        %1636 = vmatprep.subr.bf16.mxu0 0
        %1637 = vmatpush1.bf16.msra.mxu0 0
        %1638 = vmatprep.subr.bf16.mxu0 0
        %1639 = vmatpush1.bf16.msra.mxu0 0
        %1640 = vmatprep.subr.bf16.mxu0 0
        %1641 = vmatpush1.bf16.msra.mxu0 0
        %1642 = vmatprep.subr.bf16.mxu0 0
        %1643 = vmatpush1.bf16.msra.mxu0 0
        %1644 = vmatprep.subr.bf16.mxu0 0
        %1645 = vmatpush1.bf16.msra.mxu0 0
        %1646 = vmatprep.subr.bf16.mxu0 0
        %1647 = vmatpush1.bf16.msra.mxu0 0
        %1648 = vmatprep.subr.bf16.mxu0 0
        %1649 = vmatpush1.bf16.msra.mxu0 0
        %1650 = vmatprep.subr.bf16.mxu0 0
        %1651 = vmatpush1.bf16.msra.mxu0 0
        %1652 = vmatprep.subr.bf16.mxu0 0
        %1653 = vmatpush1.bf16.msra.mxu0 0
        %1654 = vmatprep.subr.bf16.mxu0 0
        %1655 = vmatpush1.bf16.msra.mxu0 0
        %1656 = vmatprep.subr.bf16.mxu0 0
        %1657 = vmatpush1.bf16.msra.mxu0 0
        %1658 = vmatprep.subr.bf16.mxu0 0
        %1659 = vmatpush1.bf16.msra.mxu0 0
        %1660 = vmatprep.subr.bf16.mxu0 0
        %1661 = vmatpush1.bf16.msra.mxu0 0
        %1662 = vmatprep.mubr.bf16.mxu0 0
        %1663 = vmatmul.mubr.bf16.gmra.mrb[0].mxu0 %v1625
        %v1664 = vpop.f32.mrb[0].mxu0
        %v1665 = vadd.f32 0.0, %v1664
        %v1666 = vpop.f32.mrb[0].mxu0
        %v1667 = vpop.f32.mrb[0].mxu0
        %v1668 = vpop.f32.mrb[0].mxu0
        %1669 = vdwg.mxu0
        %v1671 = vsel %vm1174, %v1621, 0
        %v1674 = vsel %vm1432, %v918, 0
        %1676 = vmatprep.subr.bf16.mxu0 0
        %1677 = vmatpush1.bf16.msra.mxu0 %v1674
        %1678 = vmatprep.subr.bf16.mxu0 0
        %1679 = vmatpush1.bf16.msra.mxu0 0
        %1680 = vmatprep.subr.bf16.mxu0 0
        %1681 = vmatpush1.bf16.msra.mxu0 0
        %1682 = vmatprep.subr.bf16.mxu0 0
        %1683 = vmatpush1.bf16.msra.mxu0 0
        %1684 = vmatprep.subr.bf16.mxu0 0
        %1685 = vmatpush1.bf16.msra.mxu0 0
        %1686 = vmatprep.subr.bf16.mxu0 0
        %1687 = vmatpush1.bf16.msra.mxu0 0
        %1688 = vmatprep.subr.bf16.mxu0 0
        %1689 = vmatpush1.bf16.msra.mxu0 0
        %1690 = vmatprep.subr.bf16.mxu0 0
        %1691 = vmatpush1.bf16.msra.mxu0 0
        %1692 = vmatprep.subr.bf16.mxu0 0
        %1693 = vmatpush1.bf16.msra.mxu0 0
        %1694 = vmatprep.subr.bf16.mxu0 0
        %1695 = vmatpush1.bf16.msra.mxu0 0
        %1696 = vmatprep.subr.bf16.mxu0 0
        %1697 = vmatpush1.bf16.msra.mxu0 0
        %1698 = vmatprep.subr.bf16.mxu0 0
        %1699 = vmatpush1.bf16.msra.mxu0 0
        %1700 = vmatprep.subr.bf16.mxu0 0
        %1701 = vmatpush1.bf16.msra.mxu0 0
        %1702 = vmatprep.subr.bf16.mxu0 0
        %1703 = vmatpush1.bf16.msra.mxu0 0
        %1704 = vmatprep.subr.bf16.mxu0 0
        %1705 = vmatpush1.bf16.msra.mxu0 0
        %1706 = vmatprep.subr.bf16.mxu0 0
        %1707 = vmatpush1.bf16.msra.mxu0 0
        %1708 = vmatprep.mubr.bf16.mxu0 0
        %1709 = vmatmul.mubr.bf16.gmra.mrb[0].mxu0 %v1671
        %v1710 = vpop.f32.mrb[0].mxu0
        %v1711 = vadd.f32 0.0, %v1710
        %v1712 = vpop.f32.mrb[0].mxu0
        %v1713 = vpop.f32.mrb[0].mxu0
        %v1714 = vpop.f32.mrb[0].mxu0
        %1715 = vdwg.mxu0
        %v1717 = vsel %vm1174, %v1622, 0
        %v1720 = vsel %vm1432, %v919, 0
        %1722 = vmatprep.subr.bf16.mxu0 0
        %1723 = vmatpush1.bf16.msra.mxu0 %v1720
        %1724 = vmatprep.subr.bf16.mxu0 0
        %1725 = vmatpush1.bf16.msra.mxu0 0
        %1726 = vmatprep.subr.bf16.mxu0 0
        %1727 = vmatpush1.bf16.msra.mxu0 0
        %1728 = vmatprep.subr.bf16.mxu0 0
        %1729 = vmatpush1.bf16.msra.mxu0 0
        %1730 = vmatprep.subr.bf16.mxu0 0
        %1731 = vmatpush1.bf16.msra.mxu0 0
        %1732 = vmatprep.subr.bf16.mxu0 0
        %1733 = vmatpush1.bf16.msra.mxu0 0
        %1734 = vmatprep.subr.bf16.mxu0 0
        %1735 = vmatpush1.bf16.msra.mxu0 0
        %1736 = vmatprep.subr.bf16.mxu0 0
        %1737 = vmatpush1.bf16.msra.mxu0 0
        %1738 = vmatprep.subr.bf16.mxu0 0
        %1739 = vmatpush1.bf16.msra.mxu0 0
        %1740 = vmatprep.subr.bf16.mxu0 0
        %1741 = vmatpush1.bf16.msra.mxu0 0
        %1742 = vmatprep.subr.bf16.mxu0 0
        %1743 = vmatpush1.bf16.msra.mxu0 0
        %1744 = vmatprep.subr.bf16.mxu0 0
        %1745 = vmatpush1.bf16.msra.mxu0 0
        %1746 = vmatprep.subr.bf16.mxu0 0
        %1747 = vmatpush1.bf16.msra.mxu0 0
        %1748 = vmatprep.subr.bf16.mxu0 0
        %1749 = vmatpush1.bf16.msra.mxu0 0
        %1750 = vmatprep.subr.bf16.mxu0 0
        %1751 = vmatpush1.bf16.msra.mxu0 0
        %1752 = vmatprep.subr.bf16.mxu0 0
        %1753 = vmatpush1.bf16.msra.mxu0 0
        %1754 = vmatprep.mubr.bf16.mxu0 0
        %1755 = vmatmul.mubr.bf16.gmra.mrb[0].mxu0 %v1717
        %v1756 = vpop.f32.mrb[0].mxu0
        %v1757 = vadd.f32 0.0, %v1756
        %v1758 = vpop.f32.mrb[0].mxu0
        %v1759 = vpop.f32.mrb[0].mxu0
        %v1760 = vpop.f32.mrb[0].mxu0
        %1761 = vdwg.mxu0
        %v1763 = vsel %vm1174, %v1623, 0
        %v1766 = vsel %vm1432, %v920, 0
        %1768 = vmatprep.subr.bf16.mxu0 0
        %1769 = vmatpush1.bf16.msra.mxu0 %v1766
        %1770 = vmatprep.subr.bf16.mxu0 0
        %1771 = vmatpush1.bf16.msra.mxu0 0
        %1772 = vmatprep.subr.bf16.mxu0 0
        %1773 = vmatpush1.bf16.msra.mxu0 0
        %1774 = vmatprep.subr.bf16.mxu0 0
        %1775 = vmatpush1.bf16.msra.mxu0 0
        %1776 = vmatprep.subr.bf16.mxu0 0
        %1777 = vmatpush1.bf16.msra.mxu0 0
        %1778 = vmatprep.subr.bf16.mxu0 0
        %1779 = vmatpush1.bf16.msra.mxu0 0
        %1780 = vmatprep.subr.bf16.mxu0 0
        %1781 = vmatpush1.bf16.msra.mxu0 0
        %1782 = vmatprep.subr.bf16.mxu0 0
        %1783 = vmatpush1.bf16.msra.mxu0 0
        %1784 = vmatprep.subr.bf16.mxu0 0
        %1785 = vmatpush1.bf16.msra.mxu0 0
        %1786 = vmatprep.subr.bf16.mxu0 0
        %1787 = vmatpush1.bf16.msra.mxu0 0
        %1788 = vmatprep.subr.bf16.mxu0 0
        %1789 = vmatpush1.bf16.msra.mxu0 0
        %1790 = vmatprep.subr.bf16.mxu0 0
        %1791 = vmatpush1.bf16.msra.mxu0 0
        %1792 = vmatprep.subr.bf16.mxu0 0
        %1793 = vmatpush1.bf16.msra.mxu0 0
        %1794 = vmatprep.subr.bf16.mxu0 0
        %1795 = vmatpush1.bf16.msra.mxu0 0
        %1796 = vmatprep.subr.bf16.mxu0 0
        %1797 = vmatpush1.bf16.msra.mxu0 0
        %1798 = vmatprep.subr.bf16.mxu0 0
        %1799 = vmatpush1.bf16.msra.mxu0 0
        %1800 = vmatprep.mubr.bf16.mxu0 0
        %1801 = vmatmul.mubr.bf16.gmra.mrb[0].mxu0 %v1763
        %v1802 = vpop.f32.mrb[0].mxu0
        %v1803 = vadd.f32 0.0, %v1802
        %v1804 = vpop.f32.mrb[0].mxu0
        %v1805 = vpop.f32.mrb[0].mxu0
        %v1806 = vpop.f32.mrb[0].mxu0
        %1807 = vdwg.mxu0
        %v1808 = vsel %vm959, %v1665, 0.0
        %v1809 = vsel %vm959, %v1711, 0.0
        %v1810 = vadd.f32 %v1808, %v1809
        %v1811 = vsel %vm959, %v1757, 0.0
        %v1812 = vadd.f32 %v1810, %v1811
        %v1813 = vsel %vm959, %v1803, 0.0
        %v1814 = vadd.f32 %v1812, %v1813
        %v1816 = vlaneseq
        %v1817 = vshrl.u32 %v1816, 7
        %v1818 = vsub.s32 0, %v1817
        %v1819 = vrot.slane %v921, %v1818
        %v1821 = vadd.f32 %v1814, %v1819
        %v1822 = vadd.f32 %v896, %v1821
        %v1823 = vld [vmem:[%s734] sm:$0x1]
        %v1824 = vld [vmem:[%s742] sm:$0x1]
        %v1825 = vsel %vm959, %v1822, 0.0
        %1826 = vadd.xlane.f32.xlu0 %v1825
        %v1827 = vpop.xlane.xlu0 %1826
        %v1828 = vrcp.pop 32.0
        %v1829 = vmul.f32 %v1827, %v1828
        %v1830 = vsub.f32 %v1822, %v1829
        %v1831 = vmul.f32 %v1830, %v1830
        %v1832 = vsel %vm959, %v1831, 0.0
        %1833 = vadd.xlane.f32.xlu0 %v1832
        %v1834 = vpop.xlane.xlu0 %1833
        %v1835 = vmul.f32 %v1834, %v1828
        %v1836 = vadd.f32 %v1835, 1e-05
        %v1837 = vrsqrt.pop %v1836
        %v1838 = vmul.f32 %v1830, %v1837
        %v1840 = vlaneseq
        %v1841 = vshrl.u32 %v1840, 7
        %v1842 = vsub.s32 0, %v1841
        %v1843 = vrot.slane %v1823, %v1842
        %v1845 = vmul.f32 %v1843, %v1838
        %v1847 = vlaneseq
        %v1848 = vshrl.u32 %v1847, 7
        %v1849 = vsub.s32 0, %v1848
        %v1850 = vrot.slane %v1824, %v1849
        %v1852 = vadd.f32 %v1845, %v1850
        %v1853 = vpack.c.bf16 %v1852, %v1852
        %v1854 = vld [vmem:[%s751] sm:$0xf]
        %v1855 = vld [vmem:[%s751 + $0x4] sm:$0xf]
        %v1856 = vld [vmem:[%s751 + $0x8] sm:$0xf]
        %v1857 = vld [vmem:[%s751 + $0xc] sm:$0xf]
        %v1858 = vld [vmem:[%s759] sm:$0x1]
        %v1860 = vlaneseq
        %v1861 = vshrl.u32 %v1860, 7
        %v1862 = vsub.s32 0, %v1861
        %v1863 = vrot.slane %v1858, %v1862
        %v1869 = vunpack.c.l.b16 %v1854
        %v1870 = vunpack.c.l.b16 %v1855
        %v1871 = vunpack.c.l.b16 %v1856
        %v1872 = vunpack.c.l.b16 %v1857
        %v1873 = vpack.c.b16 %v1870, %v1869
        %v1874 = vpack.c.b16 %v1872, %v1871
        %v1878 = vsel %vm959, %v1853, 0
        %1880 = vmatprep.subr.bf16.mxu0 0
        %1881 = vmatpush1.bf16.msra.mxu0 %v1873
        %1882 = vmatprep.subr.bf16.mxu0 0
        %1883 = vmatpush1.bf16.msra.mxu0 %v1874
        %1884 = vmatprep.subr.bf16.mxu0 0
        %1885 = vmatpush1.bf16.msra.mxu0 0
        %1886 = vmatprep.subr.bf16.mxu0 0
        %1887 = vmatpush1.bf16.msra.mxu0 0
        %1888 = vmatprep.subr.bf16.mxu0 0
        %1889 = vmatpush1.bf16.msra.mxu0 0
        %1890 = vmatprep.subr.bf16.mxu0 0
        %1891 = vmatpush1.bf16.msra.mxu0 0
        %1892 = vmatprep.subr.bf16.mxu0 0
        %1893 = vmatpush1.bf16.msra.mxu0 0
        %1894 = vmatprep.subr.bf16.mxu0 0
        %1895 = vmatpush1.bf16.msra.mxu0 0
        %1896 = vmatprep.subr.bf16.mxu0 0
        %1897 = vmatpush1.bf16.msra.mxu0 0
        %1898 = vmatprep.subr.bf16.mxu0 0
        %1899 = vmatpush1.bf16.msra.mxu0 0
        %1900 = vmatprep.subr.bf16.mxu0 0
        %1901 = vmatpush1.bf16.msra.mxu0 0
        %1902 = vmatprep.subr.bf16.mxu0 0
        %1903 = vmatpush1.bf16.msra.mxu0 0
        %1904 = vmatprep.subr.bf16.mxu0 0
        %1905 = vmatpush1.bf16.msra.mxu0 0
        %1906 = vmatprep.subr.bf16.mxu0 0
        %1907 = vmatpush1.bf16.msra.mxu0 0
        %1908 = vmatprep.subr.bf16.mxu0 0
        %1909 = vmatpush1.bf16.msra.mxu0 0
        %1910 = vmatprep.subr.bf16.mxu0 0
        %1911 = vmatpush1.bf16.msra.mxu0 0
        %1912 = vmatprep.mubr.bf16.mxu0 0
        %1913 = vmatmul.mubr.bf16.gmra.mrb[0].mxu0 %v1878
        %v1914 = vpop.f32.mrb[0].mxu0
        %v1915 = vadd.f32 %v1863, %v1914
        %v1916 = vpop.f32.mrb[0].mxu0
        %v1917 = vpop.f32.mrb[0].mxu0
        %v1918 = vpop.f32.mrb[0].mxu0
        %1919 = vdwg.mxu0
        %v1920 = vmul.f32 %v1915, 0.5
        %v1921 = vmul.f32 %v1915, 0.044715
        %v1922 = vmul.f32 %v1921, %v1915
        %v1923 = vmul.f32 %v1922, %v1915
        %v1924 = vadd.f32 %v1915, %v1923
        %v1925 = vmul.f32 %v1924, 0.7978846
        %v1926 = vtanh.pop %v1925
        %v1927 = vadd.f32 %v1926, 1.0
        %v1928 = vmul.f32 %v1920, %v1927
        %v1929 = vpack.c.bf16 %v1928, %v1928
        %v1930 = vld [vmem:[%s768] sm:$0xf]
        %v1931 = vld [vmem:[%s768 + $0x4] sm:$0xf]
        %v1932 = vld [vmem:[%s768 + $0x8] sm:$0xf]
        %v1933 = vld [vmem:[%s768 + $0xc] sm:$0xf]
        %v1934 = vld [vmem:[%s768 + $0x10] sm:$0xf]
        %v1935 = vld [vmem:[%s768 + $0x14] sm:$0xf]
        %v1936 = vld [vmem:[%s768 + $0x18] sm:$0xf]
        %v1937 = vld [vmem:[%s768 + $0x1c] sm:$0xf]
        %v1938 = vld [vmem:[%s768 + $0x20] sm:$0xf]
        %v1939 = vld [vmem:[%s768 + $0x24] sm:$0xf]
        %v1940 = vld [vmem:[%s768 + $0x28] sm:$0xf]
        %v1941 = vld [vmem:[%s768 + $0x2c] sm:$0xf]
        %v1942 = vld [vmem:[%s768 + $0x30] sm:$0xf]
        %v1943 = vld [vmem:[%s768 + $0x34] sm:$0xf]
        %v1944 = vld [vmem:[%s768 + $0x38] sm:$0xf]
        %v1945 = vld [vmem:[%s768 + $0x3c] sm:$0xf]
        %v1946 = vld [vmem:[%s776] sm:$0x1]
        %v1948 = vlaneseq
        %v1949 = vshrl.u32 %v1948, 7
        %v1950 = vsub.s32 0, %v1949
        %v1951 = vrot.slane %v1946, %v1950
        %v1969 = vunpack.c.l.b16 %v1930
        %v1970 = vunpack.c.l.b16 %v1931
        %v1971 = vunpack.c.l.b16 %v1932
        %v1972 = vunpack.c.l.b16 %v1933
        %v1973 = vunpack.c.l.b16 %v1934
        %v1974 = vunpack.c.l.b16 %v1935
        %v1975 = vunpack.c.l.b16 %v1936
        %v1976 = vunpack.c.l.b16 %v1937
        %v1977 = vunpack.c.l.b16 %v1938
        %v1978 = vunpack.c.l.b16 %v1939
        %v1979 = vunpack.c.l.b16 %v1940
        %v1980 = vunpack.c.l.b16 %v1941
        %v1981 = vunpack.c.l.b16 %v1942
        %v1982 = vunpack.c.l.b16 %v1943
        %v1983 = vunpack.c.l.b16 %v1944
        %v1984 = vunpack.c.l.b16 %v1945
        %v1985 = vpack.c.b16 %v1970, %v1969
        %v1986 = vpack.c.b16 %v1972, %v1971
        %v1987 = vpack.c.b16 %v1974, %v1973
        %v1988 = vpack.c.b16 %v1976, %v1975
        %v1989 = vpack.c.b16 %v1978, %v1977
        %v1990 = vpack.c.b16 %v1980, %v1979
        %v1991 = vpack.c.b16 %v1982, %v1981
        %v1992 = vpack.c.b16 %v1984, %v1983
        %2001 = vmatprep.subr.bf16.mxu0 0
        %2002 = vmatpush1.bf16.msra.mxu0 %v1985
        %2003 = vmatprep.subr.bf16.mxu0 0
        %2004 = vmatpush1.bf16.msra.mxu0 %v1986
        %2005 = vmatprep.subr.bf16.mxu0 0
        %2006 = vmatpush1.bf16.msra.mxu0 %v1987
        %2007 = vmatprep.subr.bf16.mxu0 0
        %2008 = vmatpush1.bf16.msra.mxu0 %v1988
        %2009 = vmatprep.subr.bf16.mxu0 0
        %2010 = vmatpush1.bf16.msra.mxu0 %v1989
        %2011 = vmatprep.subr.bf16.mxu0 0
        %2012 = vmatpush1.bf16.msra.mxu0 %v1990
        %2013 = vmatprep.subr.bf16.mxu0 0
        %2014 = vmatpush1.bf16.msra.mxu0 %v1991
        %2015 = vmatprep.subr.bf16.mxu0 0
        %2016 = vmatpush1.bf16.msra.mxu0 %v1992
        %2017 = vmatprep.subr.bf16.mxu0 0
        %2018 = vmatpush1.bf16.msra.mxu0 0
        %2019 = vmatprep.subr.bf16.mxu0 0
        %2020 = vmatpush1.bf16.msra.mxu0 0
        %2021 = vmatprep.subr.bf16.mxu0 0
        %2022 = vmatpush1.bf16.msra.mxu0 0
        %2023 = vmatprep.subr.bf16.mxu0 0
        %2024 = vmatpush1.bf16.msra.mxu0 0
        %2025 = vmatprep.subr.bf16.mxu0 0
        %2026 = vmatpush1.bf16.msra.mxu0 0
        %2027 = vmatprep.subr.bf16.mxu0 0
        %2028 = vmatpush1.bf16.msra.mxu0 0
        %2029 = vmatprep.subr.bf16.mxu0 0
        %2030 = vmatpush1.bf16.msra.mxu0 0
        %2031 = vmatprep.subr.bf16.mxu0 0
        %2032 = vmatpush1.bf16.msra.mxu0 0
        %2033 = vmatprep.mubr.bf16.mxu0 0
        %2034 = vmatmul.mubr.bf16.gmra.mrb[0].mxu0 %v1929
        %v2035 = vpop.f32.mrb[0].mxu0
        %v2036 = vadd.f32 %v1951, %v2035
        %v2037 = vpop.f32.mrb[0].mxu0
        %v2038 = vpop.f32.mrb[0].mxu0
        %v2039 = vpop.f32.mrb[0].mxu0
        %2040 = vdwg.mxu0
        %v2041 = vadd.f32 %v1852, %v2036
        %v2042 = vld [vmem:[%s784] sm:$0x1]
        %v2043 = vld [vmem:[%s792] sm:$0x1]
        %v2044 = vsel %vm959, %v2041, 0.0
        %2045 = vadd.xlane.f32.xlu0 %v2044
        %v2046 = vpop.xlane.xlu0 %2045
        %v2047 = vmul.f32 %v2046, %v1828
        %v2048 = vsub.f32 %v2041, %v2047
        %v2049 = vmul.f32 %v2048, %v2048
        %v2050 = vsel %vm959, %v2049, 0.0
        %2051 = vadd.xlane.f32.xlu0 %v2050
        %v2052 = vpop.xlane.xlu0 %2051
        %v2053 = vmul.f32 %v2052, %v1828
        %v2054 = vadd.f32 %v2053, 1e-05
        %v2055 = vrsqrt.pop %v2054
        %v2056 = vmul.f32 %v2048, %v2055
        %v2058 = vlaneseq
        %v2059 = vshrl.u32 %v2058, 7
        %v2060 = vsub.s32 0, %v2059
        %v2061 = vrot.slane %v2042, %v2060
        %v2063 = vmul.f32 %v2061, %v2056
        %v2065 = vlaneseq
        %v2066 = vshrl.u32 %v2065, 7
        %v2067 = vsub.s32 0, %v2066
        %v2068 = vrot.slane %v2043, %v2067
        %v2070 = vadd.f32 %v2063, %v2068
        %2071 = vst.msk [vmem:[%s887] sm:$0xff] %vm959, %v2070
        %s2072 = sand.u32 %s406, 1
        %s2073 = scalar_lea.sflag [#allocation4], %s2072
        %s2074 = sand.u32 %s406, 1
        %s2075 = smul.addr %s2074, 8
        %s2076 = scalar_lea.vmem [#allocation23], %s2075
        // Predicated region
        $region129: #{tpu_custom_call.1} parent=71 // pred_check
          %p2077 = pneg %p416
        $region130: #{tpu_custom_call.1} parent=71 // pred_check_branch
          %2079 = sbr.rel (%p2077) target = $region132
        $region131: #{tpu_custom_call.1} parent=71 // pred_region
          %s2081 = ssub.s32 128, 128
          %2082 = vsyncadd %s2073, %s2081
          %s2083 = smul.addr %s52, 128
          %s2084 = scalar_lea.hbm %s13, %s2083
          %s2086 = sshll.u32 %s2076, 4
          %s2087 = int_to_ptr.vmem [resolvable:$true] %s2086
          %2089 = dma.vmem_to_hbm [thread:$0]  %s2087, 128, %s2084, %s2073
        $region132: #{tpu_custom_call.1} parent=71 // pred_fallthru
          _
      $region72: #{tpu_custom_call.1} parent=5 // pred_fallthru
        _
      %p2090 = scmp.le.s32.totalorder 2, %s43
      // Predicated region
      $region133: #{tpu_custom_call.1} parent=5 // pred_check
        %p2091 = pneg %p2090
      $region134: #{tpu_custom_call.1} parent=5 // pred_check_branch
        %2093 = sbr.rel (%p2091) target = $region136
      $region135: #{tpu_custom_call.1} parent=5 // pred_region
        %s2094 = ssub.s32 %s43, 2
        // Predicated region
        $region137: #{tpu_custom_call.1} parent=135 // pred_check
          %p2095 = pneg %p422
        $region138: #{tpu_custom_call.1} parent=135 // pred_check_branch
          %2097 = sbr.rel (%p2095) target = $region140
        $region139: #{tpu_custom_call.1} parent=135 // pred_region
          %s2098 = sand.u32 %s407, 1
          %s2099 = scalar_lea.sflag [#allocation4], %s2098
          %s2100 = sand.u32 %s407, 1
          %s2101 = smul.addr %s2100, 8
          %s2102 = scalar_lea.vmem [#allocation23], %s2101
          %2103 = dma.done %s2099, 128
        $region140: #{tpu_custom_call.1} parent=135 // pred_fallthru
          _
      $region136: #{tpu_custom_call.1} parent=5 // pred_fallthru
        _
    $region6: #{tpu_custom_call.1} parent=1 // loop_footer
      %s47 = sadd.s32 1, %s43
    $region7: #{tpu_custom_call.1} parent=1 // loop_footer_branch
      %42 = sbr.rel target = $region3
    $region8: #{tpu_custom_call.1} parent=1 // loop_exit
      _
    %2104 = vsyncpa [#allocation3], 1
    %s2105 = scalar_lea.sflag [#allocation3], 1
    %2106 = vsyncpa %s2105, 1
    %2107 = vsyncpa [#allocation6], 1
    %s2108 = scalar_lea.sflag [#allocation6], 1
    %2109 = vsyncpa %s2108, 1
    %2110 = vsyncpa [#allocation9], 1
    %s2111 = scalar_lea.sflag [#allocation9], 1
    %2112 = vsyncpa %s2111, 1
    %2113 = vsyncpa [#allocation12], 1
    %s2114 = scalar_lea.sflag [#allocation12], 1
    %2115 = vsyncpa %s2114, 1
    %2116 = vsyncpa [#allocation15], 1
    %s2117 = scalar_lea.sflag [#allocation15], 1
    %2118 = vsyncpa %s2117, 1
    %2119 = vsyncpa [#allocation18], 1
    %s2120 = scalar_lea.sflag [#allocation18], 1
    %2121 = vsyncpa %s2120, 1
    %2122 = vsyncpa [#allocation21], 1
    %s2123 = scalar_lea.sflag [#allocation21], 1
    %2124 = vsyncpa %s2123, 1
    %2125 = vsyncpa [#allocation4], 1
    %s2126 = scalar_lea.sflag [#allocation4], 1
    %2127 = vsyncpa %s2126, 1

</llo_original>
